<compile_context>
chip_gen: v6e
topology: v6e:2x2x1
jax: 0.10.0
libtpu: 0.0.40
codegen_flags: <defaults>
</compile_context>

<pallas_src>
import functools

import numpy as np
import jax
import jax.numpy as jnp
from jax.experimental import pallas as pl
from jax.experimental.pallas import tpu as pltpu

EXPANSION = 4


# ----------------------------- Pallas kernels --------------------------------
def _pointwise_kernel(x_ref, w_ref, s_ref, b_ref, o_ref):
    """Conv 1x1 + folded BatchNorm for one row tile: o = (x @ w) * s + b."""
    h = jnp.dot(x_ref[...], w_ref[...], preferred_element_type=jnp.float32)
    o_ref[...] = (h * s_ref[...] + b_ref[...]).astype(o_ref.dtype)


def _tail_kernel_proj(slab_ref, x_ref, w2_ref, s2_ref, b2_ref,
                      w3_ref, s3_ref, b3_ref,
                      wd_ref, sd_ref, bd_ref, o_ref):
    """Conv2(im2col GEMM)+BN2 -> Conv3+BN3, plus 1x1-conv+BN downsample, add, ReLU."""
    h = jnp.dot(slab_ref[...], w2_ref[...], preferred_element_type=jnp.float32)
    h = h * s2_ref[...] + b2_ref[...]
    h = jnp.dot(h, w3_ref[...], preferred_element_type=jnp.float32)
    h = h * s3_ref[...] + b3_ref[...]
    d = jnp.dot(x_ref[...].astype(jnp.float32), wd_ref[...],
                preferred_element_type=jnp.float32)
    d = d * sd_ref[...] + bd_ref[...]
    o_ref[...] = jnp.maximum(h + d, 0.0).astype(o_ref.dtype)


def _tail_kernel_identity(slab_ref, x_ref, w2_ref, s2_ref, b2_ref,
                          w3_ref, s3_ref, b3_ref, o_ref):
    """Same as above but the downsample branch is Identity (statically skipped)."""
    h = jnp.dot(slab_ref[...], w2_ref[...], preferred_element_type=jnp.float32)
    h = h * s2_ref[...] + b2_ref[...]
    h = jnp.dot(h, w3_ref[...], preferred_element_type=jnp.float32)
    h = h * s3_ref[...] + b3_ref[...]
    d = x_ref[...].astype(jnp.float32)
    o_ref[...] = jnp.maximum(h + d, 0.0).astype(o_ref.dtype)


# --------------------------- pallas_call wrappers -----------------------------
def _row_spec(tm, c):
    return pl.BlockSpec((tm, c), lambda i: (i, 0))


def _full_spec(shape):
    return pl.BlockSpec(shape, lambda i: (0, 0))


def _compiler_params():
    return pltpu.CompilerParams(dimension_semantics=("parallel",),
                                vmem_limit_bytes=32 * 1024 * 1024)


def _pointwise_conv_bn(x, w, s, b, tm):
    n, cin = x.shape
    cout = w.shape[1]
    return pl.pallas_call(
        _pointwise_kernel,
        out_shape=jax.ShapeDtypeStruct((n, cout), x.dtype),
        grid=(n // tm,),
        in_specs=[_row_spec(tm, cin), _full_spec(w.shape),
                  _full_spec(s.shape), _full_spec(b.shape)],
        out_specs=_row_spec(tm, cout),
        compiler_params=_compiler_params(),
    )(x, w, s, b)


def _bottleneck_tail(slab, x, w2f, s2, b2, w3, s3, b3, wd, sd, bd, identity, tm):
    n = slab.shape[0]
    planes = w3.shape[1]
    inputs = [slab, x, w2f, s2, b2, w3, s3, b3]
    in_specs = [_row_spec(tm, slab.shape[1]), _row_spec(tm, x.shape[1]),
                _full_spec(w2f.shape), _full_spec(s2.shape), _full_spec(b2.shape),
                _full_spec(w3.shape), _full_spec(s3.shape), _full_spec(b3.shape)]
    if identity:
        kernel = _tail_kernel_identity
    else:
        kernel = _tail_kernel_proj
        inputs += [wd, sd, bd]
        in_specs += [_full_spec(wd.shape), _full_spec(sd.shape), _full_spec(bd.shape)]
    return pl.pallas_call(
        kernel,
        out_shape=jax.ShapeDtypeStruct((n, planes), x.dtype),
        grid=(n // tm,),
        in_specs=in_specs,
        out_specs=_row_spec(tm, planes),
        compiler_params=_compiler_params(),
    )(*inputs)


@functools.partial(jax.jit, static_argnames=("identity", "tm"))
def bottleneck_forward(feat, nbr, w1, s1, b1, w2f, s2, b2, w3, s3, b3,
                       wd=None, sd=None, bd=None, *, identity, tm=128):
    """out = ReLU( BN3(Conv3(BN2(Conv2(BN1(Conv1(x)))))) + downsample(x) )."""
    n = feat.shape[0]
    k = nbr.shape[1]
    outc = w1.shape[1]
    n_pad = ((n + tm - 1) // tm) * tm

    feat_p = jnp.pad(feat, ((0, n_pad - n), (0, 0)))
    nbr_p = jnp.pad(nbr, ((0, n_pad - n), (0, 0)), constant_values=-1)

    # Conv1 (1x1) + BN1 for all active voxels (Pallas, row-tiled).
    h1 = _pointwise_conv_bn(feat_p, w1, s1, b1, tm)               # (n_pad, outc)

    # im2col gather of the kernel map (pure data movement; XLA gather).
    valid = nbr_p >= 0
    idx = jnp.where(valid, nbr_p, 0)
    slab = jnp.take(h1, idx, axis=0)                              # (n_pad, K, outc)
    slab = jnp.where(valid[..., None], slab, 0.0)
    slab = slab.reshape(n_pad, k * outc)                          # (n_pad, K*outc)

    out = _bottleneck_tail(slab, feat_p, w2f, s2, b2, w3, s3, b3,
                           wd, sd, bd, identity, tm)              # (n_pad, 4*outc)
    return out[:n]


# ------------------------------ glue (host) -----------------------------------
def build_kernel_map(coords, ks, dilation):
    """coords: (N, 3) int32. Returns nbr (N, K) int32, K = ks**3, -1 = missing."""
    r = ks // 2
    offs = np.array([(dx * dilation, dy * dilation, dz * dilation)
                     for dz in range(-r, r + 1)
                     for dy in range(-r, r + 1)
                     for dx in range(-r, r + 1)], dtype=np.int32)        # (K, 3)
    tgt = coords[:, None, :] + offs[None, :, :]                           # (N, K, 3)
    eq = (tgt[:, :, None, :] == coords[None, None, :, :]).all(-1)         # (N, K, N)
    found = eq.any(-1)
    nbr = np.where(found, eq.argmax(-1), -1).astype(np.int32)             # (N, K)
    return nbr


def fold_bn(gamma, beta, mean, var, eps=1e-5):
    scale = gamma / np.sqrt(var + eps)
    bias = beta - mean * scale
    return scale.astype(np.float32), bias.astype(np.float32)


def reference_forward(feat, nbr, w1, s1, b1, w2, s2, b2, w3, s3, b3,
                      wd, sd, bd, identity):
    """Plain numpy reference implementing the exact module math."""
    n = feat.shape[0]
    h1 = feat @ w1 * s1 + b1                                    # Conv1 + BN1
    acc = np.zeros((n, w2.shape[2]), np.float32)
    for k in range(w2.shape[0]):                                # Conv2 (ks^3 taps)
        idx = nbr[:, k]
        g = np.zeros((n, h1.shape[1]), np.float32)
        valid = idx >= 0
        g[valid] = h1[idx[valid]]
        acc += g @ w2[k]
    h2 = acc * s2 + b2                                          # BN2
    h3 = (h2 @ w3) * s3 + b3                                    # Conv3 + BN3
    d = feat if identity else (feat @ wd) * sd + bd             # downsample
    return np.maximum(h3 + d, 0.0)


# -------------------------------- main -----------------------------------------
def _bn_params(key, c):
    a, b, c_, d_ = jax.random.split(key, 4)
    gamma = 1.0 + 0.1 * np.asarray(jax.random.normal(a, (c,), dtype=jnp.float32))
    beta = 0.1 * np.asarray(jax.random.normal(b, (c,), dtype=jnp.float32))
    mean = 0.1 * np.asarray(jax.random.normal(c_, (c,), dtype=jnp.float32))
    var = 1.0 + 0.1 * np.abs(np.asarray(jax.random.normal(d_, (c,), dtype=jnp.float32)))
    return fold_bn(gamma, beta, mean, var)


def run_case(key, inc, outc, ks=3, dilation=1, n_points=64, tm=128):
    planes = outc * EXPANSION
    K = ks ** 3
    kc, kf, k1, k2, k3, kd, kg1, kg2, kg3, kgd = jax.random.split(key, 10)

    # Deterministic sparse voxel set: sample coords in [0, 8)^3, dedupe, take 64.
    raw = np.asarray(jax.random.randint(kc, (200, 3), 0, 8, dtype=jnp.int32))
    coords = np.unique(raw, axis=0)[:n_points].astype(np.int32)
    n = coords.shape[0]

    feat = np.asarray(jax.random.normal(kf, (n, inc), dtype=jnp.float32))

    w1 = np.asarray(jax.random.normal(k1, (inc, outc), dtype=jnp.float32)) * 0.1
    w2 = np.asarray(jax.random.normal(k2, (K, outc, outc), dtype=jnp.float32)) * 0.1
    w3 = np.asarray(jax.random.normal(k3, (outc, planes), dtype=jnp.float32)) * 0.1
    s1, b1 = _bn_params(kg1, outc)
    s2, b2 = _bn_params(kg2, outc)
    s3, b3 = _bn_params(kg3, planes)

    identity = (inc == planes)          # stride == 1
    if identity:
        wd = sd = bd = None
    else:
        wd = np.asarray(jax.random.normal(kd, (inc, planes), dtype=jnp.float32)) * 0.1
        sd, bd = _bn_params(kgd, planes)

    nbr = build_kernel_map(coords, ks, dilation)                # (N, K)
    w2f = w2.reshape(K * outc, outc)                            # flattened im2col weight

    out = bottleneck_forward(
        jnp.asarray(feat), jnp.asarray(nbr),
        jnp.asarray(w1), jnp.asarray(s1[None]), jnp.asarray(b1[None]),
        jnp.asarray(w2f), jnp.asarray(s2[None]), jnp.asarray(b2[None]),
        jnp.asarray(w3), jnp.asarray(s3[None]), jnp.asarray(b3[None]),
        None if identity else jnp.asarray(wd),
        None if identity else jnp.asarray(sd[None]),
        None if identity else jnp.asarray(bd[None]),
        identity=identity, tm=tm)
    out = jax.block_until_ready(out)

    ref = reference_forward(feat, nbr, w1, s1, b1, w2, s2, b2, w3, s3, b3,
                            wd, sd, bd, identity)
    np.testing.assert_allclose(np.asarray(out), ref, rtol=1e-3, atol=1e-3)


if __name__ == "__main__":
    key = jax.random.PRNGKey(0)
    k_a, k_b = jax.random.split(key)
    # Projection downsample: inc != outc * expansion -> 1x1 conv + BN branch.
    run_case(k_a, inc=64, outc=32)
    # Identity downsample: inc == outc * expansion -> branch statically skipped.
    run_case(k_b, inc=128, outc=32)
    print("KERNEL_OK")
</pallas_src>

<mosaic_0001>
module attributes {stable_mosaic.version = 11 : i64} {
  func.func @_pointwise_kernel(%arg0: i32, %arg1: memref<128x64xf32, #tpu.memory_space<vmem>>, %arg2: memref<64x32xf32, #tpu.memory_space<vmem>>, %arg3: memref<1x32xf32, #tpu.memory_space<vmem>>, %arg4: memref<1x32xf32, #tpu.memory_space<vmem>>, %arg5: memref<128x32xf32, #tpu.memory_space<vmem>>) attributes {dimension_semantics = [#tpu.dimension_semantics<parallel>], iteration_bounds = array<i64: 1>, scalar_prefetch = 0 : i64, scratch_operands = 0 : i64, tpu.core_type = #tpu.core_type<tc>, window_params = [{transform_indices = @transform_0, window_bounds = array<i64: 128, 64>}, {pipeline_mode = #tpu.pipeline_mode<synchronous>, transform_indices = @transform_1, window_bounds = array<i64: 64, 32>}, {pipeline_mode = #tpu.pipeline_mode<synchronous>, transform_indices = @transform_2, window_bounds = array<i64: 1, 32>}, {pipeline_mode = #tpu.pipeline_mode<synchronous>, transform_indices = @transform_3, window_bounds = array<i64: 1, 32>}, {transform_indices = @transform_4, window_bounds = array<i64: 128, 32>}]} {
    %c0 = arith.constant 0 : index
    %c0_0 = arith.constant 0 : index
    %0 = vector.load %arg1[%c0, %c0_0] : memref<128x64xf32, #tpu.memory_space<vmem>>, vector<128x64xf32>
    %c0_1 = arith.constant 0 : index
    %c0_2 = arith.constant 0 : index
    %1 = vector.load %arg2[%c0_1, %c0_2] : memref<64x32xf32, #tpu.memory_space<vmem>>, vector<64x32xf32>
    %cst = arith.constant dense<0.000000e+00> : vector<128x32xf32>
    %2 = tpu.matmul %0, %1, %cst {dimension_numbers = #tpu.dot_dimension_numbers<[1], [0], [0], [1], [0, 0, 1, 1], [], []>} : vector<128x64xf32>, vector<64x32xf32>, vector<128x32xf32> -> vector<128x32xf32>
    %c0_3 = arith.constant 0 : index
    %c0_4 = arith.constant 0 : index
    %3 = vector.load %arg3[%c0_3, %c0_4] : memref<1x32xf32, #tpu.memory_space<vmem>>, vector<1x32xf32>
    %4 = vector.broadcast %3 : vector<1x32xf32> to vector<128x32xf32>
    %5 = arith.mulf %2, %4 : vector<128x32xf32>
    %c0_5 = arith.constant 0 : index
    %c0_6 = arith.constant 0 : index
    %6 = vector.load %arg4[%c0_5, %c0_6] : memref<1x32xf32, #tpu.memory_space<vmem>>, vector<1x32xf32>
    %7 = vector.broadcast %6 : vector<1x32xf32> to vector<128x32xf32>
    %8 = arith.addf %5, %7 : vector<128x32xf32>
    %c0_7 = arith.constant 0 : index
    %c0_8 = arith.constant 0 : index
    %9 = vector.load %arg5[%c0_7, %c0_8] : memref<128x32xf32, #tpu.memory_space<vmem>>, vector<128x32xf32>
    tpu.vector_store %arg5[%c0_7, %c0_8], %8 {strides = array<i32>} : memref<128x32xf32, #tpu.memory_space<vmem>>, vector<128x32xf32>,
    return
  }
  func.func @transform_0(%arg0: i32) -> (i32, i32) {
    %c0_i32 = arith.constant 0 : i32
    %c0_i32_0 = arith.constant 0 : i32
    return %arg0, %c0_i32 : i32, i32
  }
  func.func @transform_1(%arg0: i32) -> (i32, i32) {
    %c0_i32 = arith.constant 0 : i32
    %c0_i32_0 = arith.constant 0 : i32
    %c0_i32_1 = arith.constant 0 : i32
    return %c0_i32, %c0_i32_0 : i32, i32
  }
  func.func @transform_2(%arg0: i32) -> (i32, i32) {
    %c0_i32 = arith.constant 0 : i32
    %c0_i32_0 = arith.constant 0 : i32
    %c0_i32_1 = arith.constant 0 : i32
    return %c0_i32, %c0_i32_0 : i32, i32
  }
  func.func @transform_3(%arg0: i32) -> (i32, i32) {
    %c0_i32 = arith.constant 0 : i32
    %c0_i32_0 = arith.constant 0 : i32
    %c0_i32_1 = arith.constant 0 : i32
    return %c0_i32, %c0_i32_0 : i32, i32
  }
  func.func @transform_4(%arg0: i32) -> (i32, i32) {
    %c0_i32 = arith.constant 0 : i32
    %c0_i32_0 = arith.constant 0 : i32
    return %arg0, %c0_i32 : i32, i32
  }
}

module attributes {stable_mosaic.version = 11 : i64} {
  func.func @_tail_kernel_proj(%arg0: i32, %arg1: memref<128x864xf32, #tpu.memory_space<vmem>>, %arg2: memref<128x64xf32, #tpu.memory_space<vmem>>, %arg3: memref<864x32xf32, #tpu.memory_space<vmem>>, %arg4: memref<1x32xf32, #tpu.memory_space<vmem>>, %arg5: memref<1x32xf32, #tpu.memory_space<vmem>>, %arg6: memref<32x128xf32, #tpu.memory_space<vmem>>, %arg7: memref<1x128xf32, #tpu.memory_space<vmem>>, %arg8: memref<1x128xf32, #tpu.memory_space<vmem>>, %arg9: memref<64x128xf32, #tpu.memory_space<vmem>>, %arg10: memref<1x128xf32, #tpu.memory_space<vmem>>, %arg11: memref<1x128xf32, #tpu.memory_space<vmem>>, %arg12: memref<128x128xf32, #tpu.memory_space<vmem>>) attributes {dimension_semantics = [#tpu.dimension_semantics<parallel>], iteration_bounds = array<i64: 1>, scalar_prefetch = 0 : i64, scratch_operands = 0 : i64, tpu.core_type = #tpu.core_type<tc>, window_params = [{transform_indices = @transform_0, window_bounds = array<i64: 128, 864>}, {transform_indices = @transform_1, window_bounds = array<i64: 128, 64>}, {pipeline_mode = #tpu.pipeline_mode<synchronous>, transform_indices = @transform_2, window_bounds = array<i64: 864, 32>}, {pipeline_mode = #tpu.pipeline_mode<synchronous>, transform_indices = @transform_3, window_bounds = array<i64: 1, 32>}, {pipeline_mode = #tpu.pipeline_mode<synchronous>, transform_indices = @transform_4, window_bounds = array<i64: 1, 32>}, {pipeline_mode = #tpu.pipeline_mode<synchronous>, transform_indices = @transform_5, window_bounds = array<i64: 32, 128>}, {pipeline_mode = #tpu.pipeline_mode<synchronous>, transform_indices = @transform_6, window_bounds = array<i64: 1, 128>}, {pipeline_mode = #tpu.pipeline_mode<synchronous>, transform_indices = @transform_7, window_bounds = array<i64: 1, 128>}, {pipeline_mode = #tpu.pipeline_mode<synchronous>, transform_indices = @transform_8, window_bounds = array<i64: 64, 128>}, {pipeline_mode = #tpu.pipeline_mode<synchronous>, transform_indices = @transform_9, window_bounds = array<i64: 1, 128>}, {pipeline_mode = #tpu.pipeline_mode<synchronous>, transform_indices = @transform_10, window_bounds = array<i64: 1, 128>}, {transform_indices = @transform_11, window_bounds = array<i64: 128, 128>}]} {
    %c0 = arith.constant 0 : index
    %c0_0 = arith.constant 0 : index
    %0 = vector.load %arg1[%c0, %c0_0] : memref<128x864xf32, #tpu.memory_space<vmem>>, vector<128x864xf32>
    %c0_1 = arith.constant 0 : index
    %c0_2 = arith.constant 0 : index
    %1 = vector.load %arg3[%c0_1, %c0_2] : memref<864x32xf32, #tpu.memory_space<vmem>>, vector<864x32xf32>
    %cst = arith.constant dense<0.000000e+00> : vector<128x32xf32>
    %2 = tpu.matmul %0, %1, %cst {dimension_numbers = #tpu.dot_dimension_numbers<[1], [0], [0], [1], [0, 0, 1, 1], [], []>} : vector<128x864xf32>, vector<864x32xf32>, vector<128x32xf32> -> vector<128x32xf32>
    %c0_3 = arith.constant 0 : index
    %c0_4 = arith.constant 0 : index
    %3 = vector.load %arg4[%c0_3, %c0_4] : memref<1x32xf32, #tpu.memory_space<vmem>>, vector<1x32xf32>
    %4 = vector.broadcast %3 : vector<1x32xf32> to vector<128x32xf32>
    %5 = arith.mulf %2, %4 : vector<128x32xf32>
    %c0_5 = arith.constant 0 : index
    %c0_6 = arith.constant 0 : index
    %6 = vector.load %arg5[%c0_5, %c0_6] : memref<1x32xf32, #tpu.memory_space<vmem>>, vector<1x32xf32>
    %7 = vector.broadcast %6 : vector<1x32xf32> to vector<128x32xf32>
    %8 = arith.addf %5, %7 : vector<128x32xf32>
    %c0_7 = arith.constant 0 : index
    %c0_8 = arith.constant 0 : index
    %9 = vector.load %arg6[%c0_7, %c0_8] : memref<32x128xf32, #tpu.memory_space<vmem>>, vector<32x128xf32>
    %cst_9 = arith.constant dense<0.000000e+00> : vector<128x128xf32>
    %10 = tpu.matmul %8, %9, %cst_9 {dimension_numbers = #tpu.dot_dimension_numbers<[1], [0], [0], [1], [0, 0, 1, 1], [], []>} : vector<128x32xf32>, vector<32x128xf32>, vector<128x128xf32> -> vector<128x128xf32>
    %c0_10 = arith.constant 0 : index
    %c0_11 = arith.constant 0 : index
    %11 = vector.load %arg7[%c0_10, %c0_11] : memref<1x128xf32, #tpu.memory_space<vmem>>, vector<1x128xf32>
    %12 = vector.broadcast %11 : vector<1x128xf32> to vector<128x128xf32>
    %13 = arith.mulf %10, %12 : vector<128x128xf32>
    %c0_12 = arith.constant 0 : index
    %c0_13 = arith.constant 0 : index
    %14 = vector.load %arg8[%c0_12, %c0_13] : memref<1x128xf32, #tpu.memory_space<vmem>>, vector<1x128xf32>
    %15 = vector.broadcast %14 : vector<1x128xf32> to vector<128x128xf32>
    %16 = arith.addf %13, %15 : vector<128x128xf32>
    %c0_14 = arith.constant 0 : index
    %c0_15 = arith.constant 0 : index
    %17 = vector.load %arg2[%c0_14, %c0_15] : memref<128x64xf32, #tpu.memory_space<vmem>>, vector<128x64xf32>
    %c0_16 = arith.constant 0 : index
    %c0_17 = arith.constant 0 : index
    %18 = vector.load %arg9[%c0_16, %c0_17] : memref<64x128xf32, #tpu.memory_space<vmem>>, vector<64x128xf32>
    %cst_18 = arith.constant dense<0.000000e+00> : vector<128x128xf32>
    %19 = tpu.matmul %17, %18, %cst_18 {dimension_numbers = #tpu.dot_dimension_numbers<[1], [0], [0], [1], [0, 0, 1, 1], [], []>} : vector<128x64xf32>, vector<64x128xf32>, vector<128x128xf32> -> vector<128x128xf32>
    %c0_19 = arith.constant 0 : index
    %c0_20 = arith.constant 0 : index
    %20 = vector.load %arg10[%c0_19, %c0_20] : memref<1x128xf32, #tpu.memory_space<vmem>>, vector<1x128xf32>
    %21 = vector.broadcast %20 : vector<1x128xf32> to vector<128x128xf32>
    %22 = arith.mulf %19, %21 : vector<128x128xf32>
    %c0_21 = arith.constant 0 : index
    %c0_22 = arith.constant 0 : index
    %23 = vector.load %arg11[%c0_21, %c0_22] : memref<1x128xf32, #tpu.memory_space<vmem>>, vector<1x128xf32>
    %24 = vector.broadcast %23 : vector<1x128xf32> to vector<128x128xf32>
    %25 = arith.addf %22, %24 : vector<128x128xf32>
    %26 = arith.addf %16, %25 : vector<128x128xf32>
    %cst_23 = arith.constant 0.000000e+00 : f32
    %27 = vector.broadcast %cst_23 : f32 to vector<128x128xf32>
    %28 = arith.maximumf %26, %27 : vector<128x128xf32>
    %c0_24 = arith.constant 0 : index
    %c0_25 = arith.constant 0 : index
    %29 = vector.load %arg12[%c0_24, %c0_25] : memref<128x128xf32, #tpu.memory_space<vmem>>, vector<128x128xf32>
    tpu.vector_store %arg12[%c0_24, %c0_25], %28 {strides = array<i32>} : memref<128x128xf32, #tpu.memory_space<vmem>>, vector<128x128xf32>,
    return
  }
  func.func @transform_0(%arg0: i32) -> (i32, i32) {
    %c0_i32 = arith.constant 0 : i32
    %c0_i32_0 = arith.constant 0 : i32
    return %arg0, %c0_i32 : i32, i32
  }
  func.func @transform_1(%arg0: i32) -> (i32, i32) {
    %c0_i32 = arith.constant 0 : i32
    %c0_i32_0 = arith.constant 0 : i32
    return %arg0, %c0_i32 : i32, i32
  }
  func.func @transform_2(%arg0: i32) -> (i32, i32) {
    %c0_i32 = arith.constant 0 : i32
    %c0_i32_0 = arith.constant 0 : i32
    %c0_i32_1 = arith.constant 0 : i32
    return %c0_i32, %c0_i32_0 : i32, i32
  }
  func.func @transform_3(%arg0: i32) -> (i32, i32) {
    %c0_i32 = arith.constant 0 : i32
    %c0_i32_0 = arith.constant 0 : i32
    %c0_i32_1 = arith.constant 0 : i32
    return %c0_i32, %c0_i32_0 : i32, i32
  }
  func.func @transform_4(%arg0: i32) -> (i32, i32) {
    %c0_i32 = arith.constant 0 : i32
    %c0_i32_0 = arith.constant 0 : i32
    %c0_i32_1 = arith.constant 0 : i32
    return %c0_i32, %c0_i32_0 : i32, i32
  }
  func.func @transform_5(%arg0: i32) -> (i32, i32) {
    %c0_i32 = arith.constant 0 : i32
    %c0_i32_0 = arith.constant 0 : i32
    %c0_i32_1 = arith.constant 0 : i32
    return %c0_i32, %c0_i32_0 : i32, i32
  }
  func.func @transform_6(%arg0: i32) -> (i32, i32) {
    %c0_i32 = arith.constant 0 : i32
    %c0_i32_0 = arith.constant 0 : i32
    %c0_i32_1 = arith.constant 0 : i32
    return %c0_i32, %c0_i32_0 : i32, i32
  }
  func.func @transform_7(%arg0: i32) -> (i32, i32) {
    %c0_i32 = arith.constant 0 : i32
    %c0_i32_0 = arith.constant 0 : i32
    %c0_i32_1 = arith.constant 0 : i32
    return %c0_i32, %c0_i32_0 : i32, i32
  }
  func.func @transform_8(%arg0: i32) -> (i32, i32) {
    %c0_i32 = arith.constant 0 : i32
    %c0_i32_0 = arith.constant 0 : i32
    %c0_i32_1 = arith.constant 0 : i32
    return %c0_i32, %c0_i32_0 : i32, i32
  }
  func.func @transform_9(%arg0: i32) -> (i32, i32) {
    %c0_i32 = arith.constant 0 : i32
    %c0_i32_0 = arith.constant 0 : i32
    %c0_i32_1 = arith.constant 0 : i32
    return %c0_i32, %c0_i32_0 : i32, i32
  }
  func.func @transform_10(%arg0: i32) -> (i32, i32) {
    %c0_i32 = arith.constant 0 : i32
    %c0_i32_0 = arith.constant 0 : i32
    %c0_i32_1 = arith.constant 0 : i32
    return %c0_i32, %c0_i32_0 : i32, i32
  }
  func.func @transform_11(%arg0: i32) -> (i32, i32) {
    %c0_i32 = arith.constant 0 : i32
    %c0_i32_0 = arith.constant 0 : i32
    return %arg0, %c0_i32 : i32, i32
  }
}

</mosaic_0001>

<llo_original>
// kernel: bottleneck_forward.2
$region0: #{bottleneck_forward.2}
  #allocation0 [shape = 'u32[]', space=smem, size = 0x4, offset = 0x4, fixed_abs, tag = 'smem constant byte address 0x4 - core index']
  #allocation1 [shape = 'u32[144,128]{1,0:T(1,128)}', space=vmem, size = 0x12000, scoped, tag = 'internal scratch']
  %s0 = inlined_call_operand.vmem [shape: f32[128,64], index: 0, kind: input, shape index: {}]
  %s1 = inlined_call_operand.vmem [shape: f32[64,32], index: 1, kind: input, shape index: {}]
  %s2 = inlined_call_operand.hbm [shape: f32[1,32], index: 2, kind: input, shape index: {}]
  %s3 = inlined_call_operand.hbm [shape: f32[1,32], index: 3, kind: input, shape index: {}]
  %s4 = inlined_call_operand.vmem [shape: f32[128,32], index: 4, kind: output, shape index: {}]
  %s5 = sld [smem:[#allocation0]]
  $region34: #{bottleneck_forward.2} parent=0
    _
  %s7 = ssub.s32 1, %s5
  %s8 = scalar_select 0, %s7, %s5
  $region1: #{bottleneck_forward.2} parent=0
    #allocation2 [shape = 'u8[512]{0}', space=vmem, size = 0x400, scoped, tag = 'input window, operand 2, single buffered']
    #allocation3 [shape = 's32[1]{0}', space=sflag, size = 0x4, scoped, tag = 'scoped memory for bottleneck_forward.2']
    #allocation4 [shape = 'u8[512]{0}', space=vmem, size = 0x400, scoped, tag = 'input window, operand 3, single buffered']
    #allocation5 [shape = 's32[1]{0}', space=sflag, size = 0x4, scoped, tag = 'scoped memory for bottleneck_forward.2']
    %9 = vsyncpa [#allocation3], 0
    %10 = vsyncpa [#allocation5], 0
    // Predicated region
    $region2: #{bottleneck_forward.2} parent=1 // pred_check
      _
    $region3: #{bottleneck_forward.2} parent=1 // pred_check_branch
      %12 = sbr.rel (0) target = $region5
    $region4: #{bottleneck_forward.2} parent=1 // pred_region
      _
    $region5: #{bottleneck_forward.2} parent=1 // pred_fallthru
      _
    // Predicated region
    $region6: #{bottleneck_forward.2} parent=1 // pred_check
      _
    $region7: #{bottleneck_forward.2} parent=1 // pred_check_branch
      %14 = sbr.rel (0) target = $region9
    $region8: #{bottleneck_forward.2} parent=1 // pred_region
      _
    $region9: #{bottleneck_forward.2} parent=1 // pred_fallthru
      _
    // Predicated region
    $region10: #{bottleneck_forward.2} parent=1 // pred_check
      _
    $region11: #{bottleneck_forward.2} parent=1 // pred_check_branch
      %16 = sbr.rel (0) target = $region13
    $region12: #{bottleneck_forward.2} parent=1 // pred_region
      %s18 = ssub.s32 16, 16
      %19 = vsyncadd [#allocation3], %s18
      %s21 = sshll.u32 [#allocation2], 4
      %s22 = int_to_ptr.vmem [resolvable:$true] %s21
      %24 = dma.hbm_to_vmem [thread:$0]  %s2, 16, %s22, [#allocation3]
    $region13: #{bottleneck_forward.2} parent=1 // pred_fallthru
      _
    // Predicated region
    $region14: #{bottleneck_forward.2} parent=1 // pred_check
      _
    $region15: #{bottleneck_forward.2} parent=1 // pred_check_branch
      %26 = sbr.rel (0) target = $region17
    $region16: #{bottleneck_forward.2} parent=1 // pred_region
      %s28 = ssub.s32 16, 16
      %29 = vsyncadd [#allocation5], %s28
      %s31 = sshll.u32 [#allocation4], 4
      %s32 = int_to_ptr.vmem [resolvable:$true] %s31
      %34 = dma.hbm_to_vmem [thread:$0]  %s3, 16, %s32, [#allocation5]
    $region17: #{bottleneck_forward.2} parent=1 // pred_fallthru
      _
    // Predicated region
    $region18: #{bottleneck_forward.2} parent=1 // pred_check
      _
    $region19: #{bottleneck_forward.2} parent=1 // pred_check_branch
      %36 = sbr.rel (0) target = $region21
    $region20: #{bottleneck_forward.2} parent=1 // pred_region
      %37 = dma.done [#allocation3], 16
    $region21: #{bottleneck_forward.2} parent=1 // pred_fallthru
      _
    // Predicated region
    $region22: #{bottleneck_forward.2} parent=1 // pred_check
      _
    $region23: #{bottleneck_forward.2} parent=1 // pred_check_branch
      %39 = sbr.rel (0) target = $region25
    $region24: #{bottleneck_forward.2} parent=1 // pred_region
      %40 = dma.done [#allocation5], 16
    $region25: #{bottleneck_forward.2} parent=1 // pred_fallthru
      _
    %v41 = vld [vmem:[%s0] sm:$0xff]
    %v42 = vld [vmem:[%s0 + $0x8] sm:$0xff]
    %v43 = vld [vmem:[%s0 + $0x10] sm:$0xff]
    %v44 = vld [vmem:[%s0 + $0x18] sm:$0xff]
    %v45 = vld [vmem:[%s0 + $0x20] sm:$0xff]
    %v46 = vld [vmem:[%s0 + $0x28] sm:$0xff]
    %v47 = vld [vmem:[%s0 + $0x30] sm:$0xff]
    %v48 = vld [vmem:[%s0 + $0x38] sm:$0xff]
    %v49 = vld [vmem:[%s0 + $0x40] sm:$0xff]
    %v50 = vld [vmem:[%s0 + $0x48] sm:$0xff]
    %v51 = vld [vmem:[%s0 + $0x50] sm:$0xff]
    %v52 = vld [vmem:[%s0 + $0x58] sm:$0xff]
    %v53 = vld [vmem:[%s0 + $0x60] sm:$0xff]
    %v54 = vld [vmem:[%s0 + $0x68] sm:$0xff]
    %v55 = vld [vmem:[%s0 + $0x70] sm:$0xff]
    %v56 = vld [vmem:[%s0 + $0x78] sm:$0xff]
    %v57 = vld [vmem:[%s1] sm:$0xff]
    %v58 = vld [vmem:[%s1 + $0x8] sm:$0xff]
    %v59 = vld [vmem:[%s1 + $0x10] sm:$0xff]
    %v60 = vld [vmem:[%s1 + $0x18] sm:$0xff]
    %v61 = vld [vmem:[%s1 + $0x20] sm:$0xff]
    %v62 = vld [vmem:[%s1 + $0x28] sm:$0xff]
    %v63 = vld [vmem:[%s1 + $0x30] sm:$0xff]
    %v64 = vld [vmem:[%s1 + $0x38] sm:$0xff]
    %vm65 = vcmask 523264
    %v67 = vsel %vm65, %v41, 0
    %v70 = vsel %vm65, %v42, 0
    %v73 = vsel %vm65, %v43, 0
    %v76 = vsel %vm65, %v44, 0
    %v79 = vsel %vm65, %v45, 0
    %v82 = vsel %vm65, %v46, 0
    %v85 = vsel %vm65, %v47, 0
    %v88 = vsel %vm65, %v48, 0
    %v91 = vsel %vm65, %v49, 0
    %v94 = vsel %vm65, %v50, 0
    %v97 = vsel %vm65, %v51, 0
    %v100 = vsel %vm65, %v52, 0
    %v103 = vsel %vm65, %v53, 0
    %v106 = vsel %vm65, %v54, 0
    %v109 = vsel %vm65, %v55, 0
    %v112 = vsel %vm65, %v56, 0
    %114 = vmatprep.subr.mxu0 0.0
    %115 = vmatpush1.msra.mxu0 0.0
    %116 = vmatprep.subr.mxu0 0.0
    %117 = vmatpush1.msra.mxu0 0.0
    %118 = vmatprep.subr.mxu0 0.0
    %119 = vmatpush1.msra.mxu0 0.0
    %120 = vmatprep.subr.mxu0 0.0
    %121 = vmatpush1.msra.mxu0 0.0
    %122 = vmatprep.subr.mxu0 0.0
    %123 = vmatpush1.msra.mxu0 0.0
    %124 = vmatprep.subr.mxu0 0.0
    %125 = vmatpush1.msra.mxu0 0.0
    %126 = vmatprep.subr.mxu0 0.0
    %127 = vmatpush1.msra.mxu0 0.0
    %128 = vmatprep.subr.mxu0 0.0
    %129 = vmatpush1.msra.mxu0 0.0
    %130 = vmatprep.subr.mxu0 0.0
    %131 = vmatpush1.msra.mxu0 %v64
    %132 = vmatprep.subr.mxu0 0.0
    %133 = vmatpush1.msra.mxu0 %v63
    %134 = vmatprep.subr.mxu0 0.0
    %135 = vmatpush1.msra.mxu0 %v62
    %136 = vmatprep.subr.mxu0 0.0
    %137 = vmatpush1.msra.mxu0 %v61
    %138 = vmatprep.subr.mxu0 0.0
    %139 = vmatpush1.msra.mxu0 %v60
    %140 = vmatprep.subr.mxu0 0.0
    %141 = vmatpush1.msra.mxu0 %v59
    %142 = vmatprep.subr.mxu0 0.0
    %143 = vmatpush1.msra.mxu0 %v58
    %144 = vmatprep.subr.mxu0 0.0
    %145 = vmatpush1.msra.mxu0 %v57
    %146 = vmatprep.subr.mxu0 0.0
    %147 = vmatpush2.msra.mxu0 0.0
    %148 = vmatprep.subr.mxu0 0.0
    %149 = vmatpush2.msra.mxu0 0.0
    %150 = vmatprep.subr.mxu0 0.0
    %151 = vmatpush2.msra.mxu0 0.0
    %152 = vmatprep.subr.mxu0 0.0
    %153 = vmatpush2.msra.mxu0 0.0
    %154 = vmatprep.subr.mxu0 0.0
    %155 = vmatpush2.msra.mxu0 0.0
    %156 = vmatprep.subr.mxu0 0.0
    %157 = vmatpush2.msra.mxu0 0.0
    %158 = vmatprep.subr.mxu0 0.0
    %159 = vmatpush2.msra.mxu0 0.0
    %160 = vmatprep.subr.mxu0 0.0
    %161 = vmatpush2.msra.mxu0 0.0
    %162 = vmatprep.subr.mxu0 0.0
    %163 = vmatpush2.msra.mxu0 0.0
    %164 = vmatprep.subr.mxu0 0.0
    %165 = vmatpush2.msra.mxu0 0.0
    %166 = vmatprep.subr.mxu0 0.0
    %167 = vmatpush2.msra.mxu0 0.0
    %168 = vmatprep.subr.mxu0 0.0
    %169 = vmatpush2.msra.mxu0 0.0
    %170 = vmatprep.subr.mxu0 0.0
    %171 = vmatpush2.msra.mxu0 0.0
    %172 = vmatprep.subr.mxu0 0.0
    %173 = vmatpush2.msra.mxu0 0.0
    %174 = vmatprep.subr.mxu0 0.0
    %175 = vmatpush2.msra.mxu0 0.0
    %176 = vmatprep.subr.mxu0 0.0
    %177 = vmatpush2.msra.mxu0 0.0
    %178 = vmatprep.mubr.f32.mxu0 0.0
    %179 = vmatmul.mubr.f32.gmra.mxu0 %v67
    %v180 = vpop.f32.mrf.mxu0
    %v181 = vadd.f32 0.0, %v180
    %v182 = vpop.f32.mrf.mxu0
    %183 = vmatprep.mubr.f32.mxu0 0.0
    %184 = vmatmul.mubr.f32.gmra.mxu0 %v70
    %v185 = vpop.f32.mrf.mxu0
    %v186 = vadd.f32 0.0, %v185
    %v187 = vpop.f32.mrf.mxu0
    %188 = vmatprep.mubr.f32.mxu0 0.0
    %189 = vmatmul.mubr.f32.gmra.mxu0 %v73
    %v190 = vpop.f32.mrf.mxu0
    %v191 = vadd.f32 0.0, %v190
    %v192 = vpop.f32.mrf.mxu0
    %193 = vmatprep.mubr.f32.mxu0 0.0
    %194 = vmatmul.mubr.f32.gmra.mxu0 %v76
    %v195 = vpop.f32.mrf.mxu0
    %v196 = vadd.f32 0.0, %v195
    %v197 = vpop.f32.mrf.mxu0
    %198 = vmatprep.mubr.f32.mxu0 0.0
    %199 = vmatmul.mubr.f32.gmra.mxu0 %v79
    %v200 = vpop.f32.mrf.mxu0
    %v201 = vadd.f32 0.0, %v200
    %v202 = vpop.f32.mrf.mxu0
    %203 = vmatprep.mubr.f32.mxu0 0.0
    %204 = vmatmul.mubr.f32.gmra.mxu0 %v82
    %v205 = vpop.f32.mrf.mxu0
    %v206 = vadd.f32 0.0, %v205
    %v207 = vpop.f32.mrf.mxu0
    %208 = vmatprep.mubr.f32.mxu0 0.0
    %209 = vmatmul.mubr.f32.gmra.mxu0 %v85
    %v210 = vpop.f32.mrf.mxu0
    %v211 = vadd.f32 0.0, %v210
    %v212 = vpop.f32.mrf.mxu0
    %213 = vmatprep.mubr.f32.mxu0 0.0
    %214 = vmatmul.mubr.f32.gmra.mxu0 %v88
    %v215 = vpop.f32.mrf.mxu0
    %v216 = vadd.f32 0.0, %v215
    %v217 = vpop.f32.mrf.mxu0
    %218 = vmatprep.mubr.f32.mxu0 0.0
    %219 = vmatmul.mubr.f32.gmra.mxu0 %v91
    %v220 = vpop.f32.mrf.mxu0
    %v221 = vadd.f32 0.0, %v220
    %v222 = vpop.f32.mrf.mxu0
    %223 = vmatprep.mubr.f32.mxu0 0.0
    %224 = vmatmul.mubr.f32.gmra.mxu0 %v94
    %v225 = vpop.f32.mrf.mxu0
    %v226 = vadd.f32 0.0, %v225
    %v227 = vpop.f32.mrf.mxu0
    %228 = vmatprep.mubr.f32.mxu0 0.0
    %229 = vmatmul.mubr.f32.gmra.mxu0 %v97
    %v230 = vpop.f32.mrf.mxu0
    %v231 = vadd.f32 0.0, %v230
    %v232 = vpop.f32.mrf.mxu0
    %233 = vmatprep.mubr.f32.mxu0 0.0
    %234 = vmatmul.mubr.f32.gmra.mxu0 %v100
    %v235 = vpop.f32.mrf.mxu0
    %v236 = vadd.f32 0.0, %v235
    %v237 = vpop.f32.mrf.mxu0
    %238 = vmatprep.mubr.f32.mxu0 0.0
    %239 = vmatmul.mubr.f32.gmra.mxu0 %v103
    %v240 = vpop.f32.mrf.mxu0
    %v241 = vadd.f32 0.0, %v240
    %v242 = vpop.f32.mrf.mxu0
    %243 = vmatprep.mubr.f32.mxu0 0.0
    %244 = vmatmul.mubr.f32.gmra.mxu0 %v106
    %v245 = vpop.f32.mrf.mxu0
    %v246 = vadd.f32 0.0, %v245
    %v247 = vpop.f32.mrf.mxu0
    %248 = vmatprep.mubr.f32.mxu0 0.0
    %249 = vmatmul.mubr.f32.gmra.mxu0 %v109
    %v250 = vpop.f32.mrf.mxu0
    %v251 = vadd.f32 0.0, %v250
    %v252 = vpop.f32.mrf.mxu0
    %253 = vmatprep.mubr.f32.mxu0 0.0
    %254 = vmatmul.mubr.f32.gmra.mxu0 %v112
    %v255 = vpop.f32.mrf.mxu0
    %v256 = vadd.f32 0.0, %v255
    %v257 = vpop.f32.mrf.mxu0
    %258 = vdwg.mxu0
    %v259 = vld [vmem:[#allocation2] sm:$0x1]
    %v261 = vlaneseq
    %v262 = vshrl.u32 %v261, 7
    %v263 = vsub.s32 0, %v262
    %v264 = vrot.slane %v259, %v263
    %v266 = vmul.f32 %v181, %v264
    %v267 = vmul.f32 %v186, %v264
    %v268 = vmul.f32 %v191, %v264
    %v269 = vmul.f32 %v196, %v264
    %v270 = vmul.f32 %v201, %v264
    %v271 = vmul.f32 %v206, %v264
    %v272 = vmul.f32 %v211, %v264
    %v273 = vmul.f32 %v216, %v264
    %v274 = vmul.f32 %v221, %v264
    %v275 = vmul.f32 %v226, %v264
    %v276 = vmul.f32 %v231, %v264
    %v277 = vmul.f32 %v236, %v264
    %v278 = vmul.f32 %v241, %v264
    %v279 = vmul.f32 %v246, %v264
    %v280 = vmul.f32 %v251, %v264
    %v281 = vmul.f32 %v256, %v264
    %v282 = vld [vmem:[#allocation4] sm:$0x1]
    %v284 = vlaneseq
    %v285 = vshrl.u32 %v284, 7
    %v286 = vsub.s32 0, %v285
    %v287 = vrot.slane %v282, %v286
    %v289 = vadd.f32 %v266, %v287
    %v290 = vadd.f32 %v267, %v287
    %v291 = vadd.f32 %v268, %v287
    %v292 = vadd.f32 %v269, %v287
    %v293 = vadd.f32 %v270, %v287
    %v294 = vadd.f32 %v271, %v287
    %v295 = vadd.f32 %v272, %v287
    %v296 = vadd.f32 %v273, %v287
    %v297 = vadd.f32 %v274, %v287
    %v298 = vadd.f32 %v275, %v287
    %v299 = vadd.f32 %v276, %v287
    %v300 = vadd.f32 %v277, %v287
    %v301 = vadd.f32 %v278, %v287
    %v302 = vadd.f32 %v279, %v287
    %v303 = vadd.f32 %v280, %v287
    %v304 = vadd.f32 %v281, %v287
    %vm305 = vcmask 261120
    %306 = vst.msk [vmem:[%s4] sm:$0xff] %vm305, %v289
    %307 = vst.msk [vmem:[%s4 + $0x8] sm:$0xff] %vm305, %v290
    %308 = vst.msk [vmem:[%s4 + $0x10] sm:$0xff] %vm305, %v291
    %309 = vst.msk [vmem:[%s4 + $0x18] sm:$0xff] %vm305, %v292
    %310 = vst.msk [vmem:[%s4 + $0x20] sm:$0xff] %vm305, %v293
    %311 = vst.msk [vmem:[%s4 + $0x28] sm:$0xff] %vm305, %v294
    %312 = vst.msk [vmem:[%s4 + $0x30] sm:$0xff] %vm305, %v295
    %313 = vst.msk [vmem:[%s4 + $0x38] sm:$0xff] %vm305, %v296
    %314 = vst.msk [vmem:[%s4 + $0x40] sm:$0xff] %vm305, %v297
    %315 = vst.msk [vmem:[%s4 + $0x48] sm:$0xff] %vm305, %v298
    %316 = vst.msk [vmem:[%s4 + $0x50] sm:$0xff] %vm305, %v299
    %317 = vst.msk [vmem:[%s4 + $0x58] sm:$0xff] %vm305, %v300
    %318 = vst.msk [vmem:[%s4 + $0x60] sm:$0xff] %vm305, %v301
    %319 = vst.msk [vmem:[%s4 + $0x68] sm:$0xff] %vm305, %v302
    %320 = vst.msk [vmem:[%s4 + $0x70] sm:$0xff] %vm305, %v303
    %321 = vst.msk [vmem:[%s4 + $0x78] sm:$0xff] %vm305, %v304
    // Predicated region
    $region26: #{bottleneck_forward.2} parent=1 // pred_check
      _
    $region27: #{bottleneck_forward.2} parent=1 // pred_check_branch
      %323 = sbr.rel (0) target = $region29
    $region28: #{bottleneck_forward.2} parent=1 // pred_region
      _
    $region29: #{bottleneck_forward.2} parent=1 // pred_fallthru
      _
    // Predicated region
    $region30: #{bottleneck_forward.2} parent=1 // pred_check
      _
    $region31: #{bottleneck_forward.2} parent=1 // pred_check_branch
      %325 = sbr.rel (0) target = $region33
    $region32: #{bottleneck_forward.2} parent=1 // pred_region
      _
    $region33: #{bottleneck_forward.2} parent=1 // pred_fallthru
      _
    %326 = vsyncpa [#allocation3], 1
    %327 = vsyncpa [#allocation5], 1

// kernel: bottleneck_forward.3
$region0: #{bottleneck_forward.3}
  #allocation0 [shape = 'u32[]', space=smem, size = 0x4, offset = 0x4, fixed_abs, tag = 'smem constant byte address 0x4 - core index']
  #allocation1 [shape = 'u32[144,128]{1,0:T(1,128)}', space=vmem, size = 0x12000, scoped, tag = 'internal scratch']
  %s0 = inlined_call_operand.vmem [shape: f32[128,864], index: 0, kind: input, shape index: {}]
  %s1 = inlined_call_operand.vmem [shape: f32[128,64], index: 1, kind: input, shape index: {}]
  %s2 = inlined_call_operand.vmem [shape: f32[864,32], index: 2, kind: input, shape index: {}]
  %s3 = inlined_call_operand.vmem [shape: f32[1,32], index: 3, kind: input, shape index: {}]
  %s4 = inlined_call_operand.vmem [shape: f32[1,32], index: 4, kind: input, shape index: {}]
  %s5 = inlined_call_operand.vmem [shape: f32[32,128], index: 5, kind: input, shape index: {}]
  %s6 = inlined_call_operand.vmem [shape: f32[1,128], index: 6, kind: input, shape index: {}]
  %s7 = inlined_call_operand.vmem [shape: f32[1,128], index: 7, kind: input, shape index: {}]
  %s8 = inlined_call_operand.vmem [shape: f32[64,128], index: 8, kind: input, shape index: {}]
  %s9 = inlined_call_operand.vmem [shape: f32[1,128], index: 9, kind: input, shape index: {}]
  %s10 = inlined_call_operand.vmem [shape: f32[1,128], index: 10, kind: input, shape index: {}]
  %s11 = inlined_call_operand.vmem [shape: f32[128,128], index: 11, kind: output, shape index: {}]
  %s12 = sld [smem:[#allocation0]]
  $region54: #{bottleneck_forward.3} parent=0
    _
  %s14 = ssub.s32 1, %s12
  %s15 = scalar_select 0, %s14, %s12
  // Predicated region
  $region2: #{bottleneck_forward.3} parent=0 // pred_check
    _
  $region3: #{bottleneck_forward.3} parent=0 // pred_check_branch
    %17 = sbr.rel (0) target = $region5
  $region4: #{bottleneck_forward.3} parent=0 // pred_region
    _
  $region5: #{bottleneck_forward.3} parent=0 // pred_fallthru
    _
  // Predicated region
  $region6: #{bottleneck_forward.3} parent=0 // pred_check
    _
  $region7: #{bottleneck_forward.3} parent=0 // pred_check_branch
    %19 = sbr.rel (0) target = $region9
  $region8: #{bottleneck_forward.3} parent=0 // pred_region
    _
  $region9: #{bottleneck_forward.3} parent=0 // pred_fallthru
    _
  // Predicated region
  $region10: #{bottleneck_forward.3} parent=0 // pred_check
    _
  $region11: #{bottleneck_forward.3} parent=0 // pred_check_branch
    %21 = sbr.rel (0) target = $region13
  $region12: #{bottleneck_forward.3} parent=0 // pred_region
    _
  $region13: #{bottleneck_forward.3} parent=0 // pred_fallthru
    _
  // Predicated region
  $region14: #{bottleneck_forward.3} parent=0 // pred_check
    _
  $region15: #{bottleneck_forward.3} parent=0 // pred_check_branch
    %23 = sbr.rel (0) target = $region17
  $region16: #{bottleneck_forward.3} parent=0 // pred_region
    _
  $region17: #{bottleneck_forward.3} parent=0 // pred_fallthru
    _
  // Predicated region
  $region18: #{bottleneck_forward.3} parent=0 // pred_check
    _
  $region19: #{bottleneck_forward.3} parent=0 // pred_check_branch
    %25 = sbr.rel (0) target = $region21
  $region20: #{bottleneck_forward.3} parent=0 // pred_region
    _
  $region21: #{bottleneck_forward.3} parent=0 // pred_fallthru
    _
  // Predicated region
  $region22: #{bottleneck_forward.3} parent=0 // pred_check
    _
  $region23: #{bottleneck_forward.3} parent=0 // pred_check_branch
    %27 = sbr.rel (0) target = $region25
  $region24: #{bottleneck_forward.3} parent=0 // pred_region
    _
  $region25: #{bottleneck_forward.3} parent=0 // pred_fallthru
    _
  // Predicated region
  $region26: #{bottleneck_forward.3} parent=0 // pred_check
    _
  $region27: #{bottleneck_forward.3} parent=0 // pred_check_branch
    %29 = sbr.rel (0) target = $region29
  $region28: #{bottleneck_forward.3} parent=0 // pred_region
    _
  $region29: #{bottleneck_forward.3} parent=0 // pred_fallthru
    _
  // Predicated region
  $region30: #{bottleneck_forward.3} parent=0 // pred_check
    _
  $region31: #{bottleneck_forward.3} parent=0 // pred_check_branch
    %31 = sbr.rel (0) target = $region33
  $region32: #{bottleneck_forward.3} parent=0 // pred_region
    _
  $region33: #{bottleneck_forward.3} parent=0 // pred_fallthru
    _
  // Predicated region
  $region34: #{bottleneck_forward.3} parent=0 // pred_check
    _
  $region35: #{bottleneck_forward.3} parent=0 // pred_check_branch
    %33 = sbr.rel (0) target = $region37
  $region36: #{bottleneck_forward.3} parent=0 // pred_region
    _
  $region37: #{bottleneck_forward.3} parent=0 // pred_fallthru
    _
  // Predicated region
  $region38: #{bottleneck_forward.3} parent=0 // pred_check
    _
  $region39: #{bottleneck_forward.3} parent=0 // pred_check_branch
    %35 = sbr.rel (0) target = $region41
  $region40: #{bottleneck_forward.3} parent=0 // pred_region
    _
  $region41: #{bottleneck_forward.3} parent=0 // pred_fallthru
    _
  // Predicated region
  $region42: #{bottleneck_forward.3} parent=0 // pred_check
    _
  $region43: #{bottleneck_forward.3} parent=0 // pred_check_branch
    %37 = sbr.rel (0) target = $region45
  $region44: #{bottleneck_forward.3} parent=0 // pred_region
    _
  $region45: #{bottleneck_forward.3} parent=0 // pred_fallthru
    _
  %v38 = vld [vmem:[%s0] sm:$0xff]
  %v39 = vld [vmem:[%s0 + $0x8] sm:$0xff]
  %v40 = vld [vmem:[%s0 + $0x10] sm:$0xff]
  %v41 = vld [vmem:[%s0 + $0x18] sm:$0xff]
  %v42 = vld [vmem:[%s0 + $0x20] sm:$0xff]
  %v43 = vld [vmem:[%s0 + $0x28] sm:$0xff]
  %v44 = vld [vmem:[%s0 + $0x30] sm:$0xff]
  %v45 = vld [vmem:[%s0 + $0x38] sm:$0xff]
  %v46 = vld [vmem:[%s0 + $0x40] sm:$0xff]
  %v47 = vld [vmem:[%s0 + $0x48] sm:$0xff]
  %v48 = vld [vmem:[%s0 + $0x50] sm:$0xff]
  %v49 = vld [vmem:[%s0 + $0x58] sm:$0xff]
  %v50 = vld [vmem:[%s0 + $0x60] sm:$0xff]
  %v51 = vld [vmem:[%s0 + $0x68] sm:$0xff]
  %v52 = vld [vmem:[%s0 + $0x70] sm:$0xff]
  %v53 = vld [vmem:[%s0 + $0x78] sm:$0xff]
  %v54 = vld [vmem:[%s0 + $0x80] sm:$0xff]
  %v55 = vld [vmem:[%s0 + $0x88] sm:$0xff]
  %v56 = vld [vmem:[%s0 + $0x90] sm:$0xff]
  %v57 = vld [vmem:[%s0 + $0x98] sm:$0xff]
  %v58 = vld [vmem:[%s0 + $0xa0] sm:$0xff]
  %v59 = vld [vmem:[%s0 + $0xa8] sm:$0xff]
  %v60 = vld [vmem:[%s0 + $0xb0] sm:$0xff]
  %v61 = vld [vmem:[%s0 + $0xb8] sm:$0xff]
  %v62 = vld [vmem:[%s0 + $0xc0] sm:$0xff]
  %v63 = vld [vmem:[%s0 + $0xc8] sm:$0xff]
  %v64 = vld [vmem:[%s0 + $0xd0] sm:$0xff]
  %v65 = vld [vmem:[%s0 + $0xd8] sm:$0xff]
  %v66 = vld [vmem:[%s0 + $0xe0] sm:$0xff]
  %v67 = vld [vmem:[%s0 + $0xe8] sm:$0xff]
  %v68 = vld [vmem:[%s0 + $0xf0] sm:$0xff]
  %v69 = vld [vmem:[%s0 + $0xf8] sm:$0xff]
  %v70 = vld [vmem:[%s0 + $0x100] sm:$0xff]
  %v71 = vld [vmem:[%s0 + $0x108] sm:$0xff]
  %v72 = vld [vmem:[%s0 + $0x110] sm:$0xff]
  %v73 = vld [vmem:[%s0 + $0x118] sm:$0xff]
  %v74 = vld [vmem:[%s0 + $0x120] sm:$0xff]
  %v75 = vld [vmem:[%s0 + $0x128] sm:$0xff]
  %v76 = vld [vmem:[%s0 + $0x130] sm:$0xff]
  %v77 = vld [vmem:[%s0 + $0x138] sm:$0xff]
  %v78 = vld [vmem:[%s0 + $0x140] sm:$0xff]
  %v79 = vld [vmem:[%s0 + $0x148] sm:$0xff]
  %v80 = vld [vmem:[%s0 + $0x150] sm:$0xff]
  %v81 = vld [vmem:[%s0 + $0x158] sm:$0xff]
  %v82 = vld [vmem:[%s0 + $0x160] sm:$0xff]
  %v83 = vld [vmem:[%s0 + $0x168] sm:$0xff]
  %v84 = vld [vmem:[%s0 + $0x170] sm:$0xff]
  %v85 = vld [vmem:[%s0 + $0x178] sm:$0xff]
  %v86 = vld [vmem:[%s0 + $0x180] sm:$0xff]
  %v87 = vld [vmem:[%s0 + $0x188] sm:$0xff]
  %v88 = vld [vmem:[%s0 + $0x190] sm:$0xff]
  %v89 = vld [vmem:[%s0 + $0x198] sm:$0xff]
  %v90 = vld [vmem:[%s0 + $0x1a0] sm:$0xff]
  %v91 = vld [vmem:[%s0 + $0x1a8] sm:$0xff]
  %v92 = vld [vmem:[%s0 + $0x1b0] sm:$0xff]
  %v93 = vld [vmem:[%s0 + $0x1b8] sm:$0xff]
  %v94 = vld [vmem:[%s0 + $0x1c0] sm:$0xff]
  %v95 = vld [vmem:[%s0 + $0x1c8] sm:$0xff]
  %v96 = vld [vmem:[%s0 + $0x1d0] sm:$0xff]
  %v97 = vld [vmem:[%s0 + $0x1d8] sm:$0xff]
  %v98 = vld [vmem:[%s0 + $0x1e0] sm:$0xff]
  %v99 = vld [vmem:[%s0 + $0x1e8] sm:$0xff]
  %v100 = vld [vmem:[%s0 + $0x1f0] sm:$0xff]
  %v101 = vld [vmem:[%s0 + $0x1f8] sm:$0xff]
  %v102 = vld [vmem:[%s0 + $0x200] sm:$0xff]
  %v103 = vld [vmem:[%s0 + $0x208] sm:$0xff]
  %v104 = vld [vmem:[%s0 + $0x210] sm:$0xff]
  %v105 = vld [vmem:[%s0 + $0x218] sm:$0xff]
  %v106 = vld [vmem:[%s0 + $0x220] sm:$0xff]
  %v107 = vld [vmem:[%s0 + $0x228] sm:$0xff]
  %v108 = vld [vmem:[%s0 + $0x230] sm:$0xff]
  %v109 = vld [vmem:[%s0 + $0x238] sm:$0xff]
  %v110 = vld [vmem:[%s0 + $0x240] sm:$0xff]
  %v111 = vld [vmem:[%s0 + $0x248] sm:$0xff]
  %v112 = vld [vmem:[%s0 + $0x250] sm:$0xff]
  %v113 = vld [vmem:[%s0 + $0x258] sm:$0xff]
  %v114 = vld [vmem:[%s0 + $0x260] sm:$0xff]
  %v115 = vld [vmem:[%s0 + $0x268] sm:$0xff]
  %v116 = vld [vmem:[%s0 + $0x270] sm:$0xff]
  %v117 = vld [vmem:[%s0 + $0x278] sm:$0xff]
  %v118 = vld [vmem:[%s0 + $0x280] sm:$0xff]
  %v119 = vld [vmem:[%s0 + $0x288] sm:$0xff]
  %v120 = vld [vmem:[%s0 + $0x290] sm:$0xff]
  %v121 = vld [vmem:[%s0 + $0x298] sm:$0xff]
  %v122 = vld [vmem:[%s0 + $0x2a0] sm:$0xff]
  %v123 = vld [vmem:[%s0 + $0x2a8] sm:$0xff]
  %v124 = vld [vmem:[%s0 + $0x2b0] sm:$0xff]
  %v125 = vld [vmem:[%s0 + $0x2b8] sm:$0xff]
  %v126 = vld [vmem:[%s0 + $0x2c0] sm:$0xff]
  %v127 = vld [vmem:[%s0 + $0x2c8] sm:$0xff]
  %v128 = vld [vmem:[%s0 + $0x2d0] sm:$0xff]
  %v129 = vld [vmem:[%s0 + $0x2d8] sm:$0xff]
  %v130 = vld [vmem:[%s0 + $0x2e0] sm:$0xff]
  %v131 = vld [vmem:[%s0 + $0x2e8] sm:$0xff]
  %v132 = vld [vmem:[%s0 + $0x2f0] sm:$0xff]
  %v133 = vld [vmem:[%s0 + $0x2f8] sm:$0xff]
  %v134 = vld [vmem:[%s0 + $0x300] sm:$0xff]
  %v135 = vld [vmem:[%s0 + $0x308] sm:$0xff]
  %v136 = vld [vmem:[%s0 + $0x310] sm:$0xff]
  %v137 = vld [vmem:[%s0 + $0x318] sm:$0xff]
  %v138 = vld [vmem:[%s0 + $0x320] sm:$0xff]
  %v139 = vld [vmem:[%s0 + $0x328] sm:$0xff]
  %v140 = vld [vmem:[%s0 + $0x330] sm:$0xff]
  %v141 = vld [vmem:[%s0 + $0x338] sm:$0xff]
  %v142 = vld [vmem:[%s0 + $0x340] sm:$0xff]
  %v143 = vld [vmem:[%s0 + $0x348] sm:$0xff]
  %v144 = vld [vmem:[%s0 + $0x350] sm:$0xff]
  %v145 = vld [vmem:[%s0 + $0x358] sm:$0xff]
  %v146 = vld [vmem:[%s0 + $0x360] sm:$0xff]
  %v147 = vld [vmem:[%s0 + $0x368] sm:$0xff]
  %v148 = vld [vmem:[%s0 + $0x370] sm:$0xff]
  %v149 = vld [vmem:[%s0 + $0x378] sm:$0xff]
  %v150 = vld [vmem:[%s2] sm:$0xff]
  %v151 = vld [vmem:[%s2 + $0x8] sm:$0xff]
  %v152 = vld [vmem:[%s2 + $0x10] sm:$0xff]
  %v153 = vld [vmem:[%s2 + $0x18] sm:$0xff]
  %v154 = vld [vmem:[%s2 + $0x20] sm:$0xff]
  %v155 = vld [vmem:[%s2 + $0x28] sm:$0xff]
  %v156 = vld [vmem:[%s2 + $0x30] sm:$0xff]
  %v157 = vld [vmem:[%s2 + $0x38] sm:$0xff]
  %v158 = vld [vmem:[%s2 + $0x40] sm:$0xff]
  %v159 = vld [vmem:[%s2 + $0x48] sm:$0xff]
  %v160 = vld [vmem:[%s2 + $0x50] sm:$0xff]
  %v161 = vld [vmem:[%s2 + $0x58] sm:$0xff]
  %v162 = vld [vmem:[%s2 + $0x60] sm:$0xff]
  %v163 = vld [vmem:[%s2 + $0x68] sm:$0xff]
  %v164 = vld [vmem:[%s2 + $0x70] sm:$0xff]
  %v165 = vld [vmem:[%s2 + $0x78] sm:$0xff]
  %v166 = vld [vmem:[%s2 + $0x80] sm:$0xff]
  %v167 = vld [vmem:[%s2 + $0x88] sm:$0xff]
  %v168 = vld [vmem:[%s2 + $0x90] sm:$0xff]
  %v169 = vld [vmem:[%s2 + $0x98] sm:$0xff]
  %v170 = vld [vmem:[%s2 + $0xa0] sm:$0xff]
  %v171 = vld [vmem:[%s2 + $0xa8] sm:$0xff]
  %v172 = vld [vmem:[%s2 + $0xb0] sm:$0xff]
  %v173 = vld [vmem:[%s2 + $0xb8] sm:$0xff]
  %v174 = vld [vmem:[%s2 + $0xc0] sm:$0xff]
  %v175 = vld [vmem:[%s2 + $0xc8] sm:$0xff]
  %v176 = vld [vmem:[%s2 + $0xd0] sm:$0xff]
  %v177 = vld [vmem:[%s2 + $0xd8] sm:$0xff]
  %v178 = vld [vmem:[%s2 + $0xe0] sm:$0xff]
  %v179 = vld [vmem:[%s2 + $0xe8] sm:$0xff]
  %v180 = vld [vmem:[%s2 + $0xf0] sm:$0xff]
  %v181 = vld [vmem:[%s2 + $0xf8] sm:$0xff]
  %v182 = vld [vmem:[%s2 + $0x100] sm:$0xff]
  %v183 = vld [vmem:[%s2 + $0x108] sm:$0xff]
  %v184 = vld [vmem:[%s2 + $0x110] sm:$0xff]
  %v185 = vld [vmem:[%s2 + $0x118] sm:$0xff]
  %v186 = vld [vmem:[%s2 + $0x120] sm:$0xff]
  %v187 = vld [vmem:[%s2 + $0x128] sm:$0xff]
  %v188 = vld [vmem:[%s2 + $0x130] sm:$0xff]
  %v189 = vld [vmem:[%s2 + $0x138] sm:$0xff]
  %v190 = vld [vmem:[%s2 + $0x140] sm:$0xff]
  %v191 = vld [vmem:[%s2 + $0x148] sm:$0xff]
  %v192 = vld [vmem:[%s2 + $0x150] sm:$0xff]
  %v193 = vld [vmem:[%s2 + $0x158] sm:$0xff]
  %v194 = vld [vmem:[%s2 + $0x160] sm:$0xff]
  %v195 = vld [vmem:[%s2 + $0x168] sm:$0xff]
  %v196 = vld [vmem:[%s2 + $0x170] sm:$0xff]
  %v197 = vld [vmem:[%s2 + $0x178] sm:$0xff]
  %v198 = vld [vmem:[%s2 + $0x180] sm:$0xff]
  %v199 = vld [vmem:[%s2 + $0x188] sm:$0xff]
  %v200 = vld [vmem:[%s2 + $0x190] sm:$0xff]
  %v201 = vld [vmem:[%s2 + $0x198] sm:$0xff]
  %v202 = vld [vmem:[%s2 + $0x1a0] sm:$0xff]
  %v203 = vld [vmem:[%s2 + $0x1a8] sm:$0xff]
  %v204 = vld [vmem:[%s2 + $0x1b0] sm:$0xff]
  %v205 = vld [vmem:[%s2 + $0x1b8] sm:$0xff]
  %v206 = vld [vmem:[%s2 + $0x1c0] sm:$0xff]
  %v207 = vld [vmem:[%s2 + $0x1c8] sm:$0xff]
  %v208 = vld [vmem:[%s2 + $0x1d0] sm:$0xff]
  %v209 = vld [vmem:[%s2 + $0x1d8] sm:$0xff]
  %v210 = vld [vmem:[%s2 + $0x1e0] sm:$0xff]
  %v211 = vld [vmem:[%s2 + $0x1e8] sm:$0xff]
  %v212 = vld [vmem:[%s2 + $0x1f0] sm:$0xff]
  %v213 = vld [vmem:[%s2 + $0x1f8] sm:$0xff]
  %v214 = vld [vmem:[%s2 + $0x200] sm:$0xff]
  %v215 = vld [vmem:[%s2 + $0x208] sm:$0xff]
  %v216 = vld [vmem:[%s2 + $0x210] sm:$0xff]
  %v217 = vld [vmem:[%s2 + $0x218] sm:$0xff]
  %v218 = vld [vmem:[%s2 + $0x220] sm:$0xff]
  %v219 = vld [vmem:[%s2 + $0x228] sm:$0xff]
  %v220 = vld [vmem:[%s2 + $0x230] sm:$0xff]
  %v221 = vld [vmem:[%s2 + $0x238] sm:$0xff]
  %v222 = vld [vmem:[%s2 + $0x240] sm:$0xff]
  %v223 = vld [vmem:[%s2 + $0x248] sm:$0xff]
  %v224 = vld [vmem:[%s2 + $0x250] sm:$0xff]
  %v225 = vld [vmem:[%s2 + $0x258] sm:$0xff]
  %v226 = vld [vmem:[%s2 + $0x260] sm:$0xff]
  %v227 = vld [vmem:[%s2 + $0x268] sm:$0xff]
  %v228 = vld [vmem:[%s2 + $0x270] sm:$0xff]
  %v229 = vld [vmem:[%s2 + $0x278] sm:$0xff]
  %v230 = vld [vmem:[%s2 + $0x280] sm:$0xff]
  %v231 = vld [vmem:[%s2 + $0x288] sm:$0xff]
  %v232 = vld [vmem:[%s2 + $0x290] sm:$0xff]
  %v233 = vld [vmem:[%s2 + $0x298] sm:$0xff]
  %v234 = vld [vmem:[%s2 + $0x2a0] sm:$0xff]
  %v235 = vld [vmem:[%s2 + $0x2a8] sm:$0xff]
  %v236 = vld [vmem:[%s2 + $0x2b0] sm:$0xff]
  %v237 = vld [vmem:[%s2 + $0x2b8] sm:$0xff]
  %v238 = vld [vmem:[%s2 + $0x2c0] sm:$0xff]
  %v239 = vld [vmem:[%s2 + $0x2c8] sm:$0xff]
  %v240 = vld [vmem:[%s2 + $0x2d0] sm:$0xff]
  %v241 = vld [vmem:[%s2 + $0x2d8] sm:$0xff]
  %v242 = vld [vmem:[%s2 + $0x2e0] sm:$0xff]
  %v243 = vld [vmem:[%s2 + $0x2e8] sm:$0xff]
  %v244 = vld [vmem:[%s2 + $0x2f0] sm:$0xff]
  %v245 = vld [vmem:[%s2 + $0x2f8] sm:$0xff]
  %v246 = vld [vmem:[%s2 + $0x300] sm:$0xff]
  %v247 = vld [vmem:[%s2 + $0x308] sm:$0xff]
  %v248 = vld [vmem:[%s2 + $0x310] sm:$0xff]
  %v249 = vld [vmem:[%s2 + $0x318] sm:$0xff]
  %v250 = vld [vmem:[%s2 + $0x320] sm:$0xff]
  %v251 = vld [vmem:[%s2 + $0x328] sm:$0xff]
  %v252 = vld [vmem:[%s2 + $0x330] sm:$0xff]
  %v253 = vld [vmem:[%s2 + $0x338] sm:$0xff]
  %v254 = vld [vmem:[%s2 + $0x340] sm:$0xff]
  %v255 = vld [vmem:[%s2 + $0x348] sm:$0xff]
  %v256 = vld [vmem:[%s2 + $0x350] sm:$0xff]
  %v257 = vld [vmem:[%s2 + $0x358] sm:$0xff]
  %vm258 = vcmask 785408
  %v260 = vsel %vm258, %v44, 0
  %v263 = vsel %vm258, %v51, 0
  %v266 = vsel %vm258, %v58, 0
  %v269 = vsel %vm258, %v65, 0
  %v272 = vsel %vm258, %v72, 0
  %v275 = vsel %vm258, %v79, 0
  %v278 = vsel %vm258, %v86, 0
  %v281 = vsel %vm258, %v93, 0
  %v284 = vsel %vm258, %v100, 0
  %v287 = vsel %vm258, %v107, 0
  %v290 = vsel %vm258, %v114, 0
  %v293 = vsel %vm258, %v121, 0
  %v296 = vsel %vm258, %v128, 0
  %v299 = vsel %vm258, %v135, 0
  %v302 = vsel %vm258, %v142, 0
  %v305 = vsel %vm258, %v149, 0
  %307 = vmatprep.subr.mxu0 0.0
  %308 = vmatpush1.msra.mxu0 %v165
  %309 = vmatprep.subr.mxu0 0.0
  %310 = vmatpush1.msra.mxu0 %v164
  %311 = vmatprep.subr.mxu0 0.0
  %312 = vmatpush1.msra.mxu0 %v163
  %313 = vmatprep.subr.mxu0 0.0
  %314 = vmatpush1.msra.mxu0 %v162
  %315 = vmatprep.subr.mxu0 0.0
  %316 = vmatpush1.msra.mxu0 %v161
  %317 = vmatprep.subr.mxu0 0.0
  %318 = vmatpush1.msra.mxu0 %v160
  %319 = vmatprep.subr.mxu0 0.0
  %320 = vmatpush1.msra.mxu0 %v159
  %321 = vmatprep.subr.mxu0 0.0
  %322 = vmatpush1.msra.mxu0 %v158
  %323 = vmatprep.subr.mxu0 0.0
  %324 = vmatpush1.msra.mxu0 %v157
  %325 = vmatprep.subr.mxu0 0.0
  %326 = vmatpush1.msra.mxu0 %v156
  %327 = vmatprep.subr.mxu0 0.0
  %328 = vmatpush1.msra.mxu0 %v155
  %329 = vmatprep.subr.mxu0 0.0
  %330 = vmatpush1.msra.mxu0 %v154
  %331 = vmatprep.subr.mxu0 0.0
  %332 = vmatpush1.msra.mxu0 %v153
  %333 = vmatprep.subr.mxu0 0.0
  %334 = vmatpush1.msra.mxu0 %v152
  %335 = vmatprep.subr.mxu0 0.0
  %336 = vmatpush1.msra.mxu0 %v151
  %337 = vmatprep.subr.mxu0 0.0
  %338 = vmatpush1.msra.mxu0 %v150
  %339 = vmatprep.subr.mxu0 0.0
  %340 = vmatpush2.msra.mxu0 %v181
  %341 = vmatprep.subr.mxu0 0.0
  %342 = vmatpush2.msra.mxu0 %v180
  %343 = vmatprep.subr.mxu0 0.0
  %344 = vmatpush2.msra.mxu0 %v179
  %345 = vmatprep.subr.mxu0 0.0
  %346 = vmatpush2.msra.mxu0 %v178
  %347 = vmatprep.subr.mxu0 0.0
  %348 = vmatpush2.msra.mxu0 %v177
  %349 = vmatprep.subr.mxu0 0.0
  %350 = vmatpush2.msra.mxu0 %v176
  %351 = vmatprep.subr.mxu0 0.0
  %352 = vmatpush2.msra.mxu0 %v175
  %353 = vmatprep.subr.mxu0 0.0
  %354 = vmatpush2.msra.mxu0 %v174
  %355 = vmatprep.subr.mxu0 0.0
  %356 = vmatpush2.msra.mxu0 %v173
  %357 = vmatprep.subr.mxu0 0.0
  %358 = vmatpush2.msra.mxu0 %v172
  %359 = vmatprep.subr.mxu0 0.0
  %360 = vmatpush2.msra.mxu0 %v171
  %361 = vmatprep.subr.mxu0 0.0
  %362 = vmatpush2.msra.mxu0 %v170
  %363 = vmatprep.subr.mxu0 0.0
  %364 = vmatpush2.msra.mxu0 %v169
  %365 = vmatprep.subr.mxu0 0.0
  %366 = vmatpush2.msra.mxu0 %v168
  %367 = vmatprep.subr.mxu0 0.0
  %368 = vmatpush2.msra.mxu0 %v167
  %369 = vmatprep.subr.mxu0 0.0
  %370 = vmatpush2.msra.mxu0 %v166
  %371 = vmatprep.mubr.f32.mxu0 %v39
  %372 = vmatmul.mubr.f32.gmra.mxu0 %v38
  %v373 = vpop.f32.mrf.mxu0
  %v374 = vadd.f32 0.0, %v373
  %v375 = vpop.f32.mrf.mxu0
  %376 = vmatprep.mubr.f32.mxu0 %v46
  %377 = vmatmul.mubr.f32.gmra.mxu0 %v45
  %v378 = vpop.f32.mrf.mxu0
  %v379 = vadd.f32 0.0, %v378
  %v380 = vpop.f32.mrf.mxu0
  %381 = vmatprep.mubr.f32.mxu0 %v53
  %382 = vmatmul.mubr.f32.gmra.mxu0 %v52
  %v383 = vpop.f32.mrf.mxu0
  %v384 = vadd.f32 0.0, %v383
  %v385 = vpop.f32.mrf.mxu0
  %386 = vmatprep.mubr.f32.mxu0 %v60
  %387 = vmatmul.mubr.f32.gmra.mxu0 %v59
  %v388 = vpop.f32.mrf.mxu0
  %v389 = vadd.f32 0.0, %v388
  %v390 = vpop.f32.mrf.mxu0
  %391 = vmatprep.mubr.f32.mxu0 %v67
  %392 = vmatmul.mubr.f32.gmra.mxu0 %v66
  %v393 = vpop.f32.mrf.mxu0
  %v394 = vadd.f32 0.0, %v393
  %v395 = vpop.f32.mrf.mxu0
  %396 = vmatprep.mubr.f32.mxu0 %v74
  %397 = vmatmul.mubr.f32.gmra.mxu0 %v73
  %v398 = vpop.f32.mrf.mxu0
  %v399 = vadd.f32 0.0, %v398
  %v400 = vpop.f32.mrf.mxu0
  %401 = vmatprep.mubr.f32.mxu0 %v81
  %402 = vmatmul.mubr.f32.gmra.mxu0 %v80
  %v403 = vpop.f32.mrf.mxu0
  %v404 = vadd.f32 0.0, %v403
  %v405 = vpop.f32.mrf.mxu0
  %406 = vmatprep.mubr.f32.mxu0 %v88
  %407 = vmatmul.mubr.f32.gmra.mxu0 %v87
  %v408 = vpop.f32.mrf.mxu0
  %v409 = vadd.f32 0.0, %v408
  %v410 = vpop.f32.mrf.mxu0
  %411 = vmatprep.mubr.f32.mxu0 %v95
  %412 = vmatmul.mubr.f32.gmra.mxu0 %v94
  %v413 = vpop.f32.mrf.mxu0
  %v414 = vadd.f32 0.0, %v413
  %v415 = vpop.f32.mrf.mxu0
  %416 = vmatprep.mubr.f32.mxu0 %v102
  %417 = vmatmul.mubr.f32.gmra.mxu0 %v101
  %v418 = vpop.f32.mrf.mxu0
  %v419 = vadd.f32 0.0, %v418
  %v420 = vpop.f32.mrf.mxu0
  %421 = vmatprep.mubr.f32.mxu0 %v109
  %422 = vmatmul.mubr.f32.gmra.mxu0 %v108
  %v423 = vpop.f32.mrf.mxu0
  %v424 = vadd.f32 0.0, %v423
  %v425 = vpop.f32.mrf.mxu0
  %426 = vmatprep.mubr.f32.mxu0 %v116
  %427 = vmatmul.mubr.f32.gmra.mxu0 %v115
  %v428 = vpop.f32.mrf.mxu0
  %v429 = vadd.f32 0.0, %v428
  %v430 = vpop.f32.mrf.mxu0
  %431 = vmatprep.mubr.f32.mxu0 %v123
  %432 = vmatmul.mubr.f32.gmra.mxu0 %v122
  %v433 = vpop.f32.mrf.mxu0
  %v434 = vadd.f32 0.0, %v433
  %v435 = vpop.f32.mrf.mxu0
  %436 = vmatprep.mubr.f32.mxu0 %v130
  %437 = vmatmul.mubr.f32.gmra.mxu0 %v129
  %v438 = vpop.f32.mrf.mxu0
  %v439 = vadd.f32 0.0, %v438
  %v440 = vpop.f32.mrf.mxu0
  %441 = vmatprep.mubr.f32.mxu0 %v137
  %442 = vmatmul.mubr.f32.gmra.mxu0 %v136
  %v443 = vpop.f32.mrf.mxu0
  %v444 = vadd.f32 0.0, %v443
  %v445 = vpop.f32.mrf.mxu0
  %446 = vmatprep.mubr.f32.mxu0 %v144
  %447 = vmatmul.mubr.f32.gmra.mxu0 %v143
  %v448 = vpop.f32.mrf.mxu0
  %v449 = vadd.f32 0.0, %v448
  %v450 = vpop.f32.mrf.mxu0
  %451 = vdwg.mxu0
  %452 = vmatprep.subr.mxu0 0.0
  %453 = vmatpush1.msra.mxu0 %v197
  %454 = vmatprep.subr.mxu0 0.0
  %455 = vmatpush1.msra.mxu0 %v196
  %456 = vmatprep.subr.mxu0 0.0
  %457 = vmatpush1.msra.mxu0 %v195
  %458 = vmatprep.subr.mxu0 0.0
  %459 = vmatpush1.msra.mxu0 %v194
  %460 = vmatprep.subr.mxu0 0.0
  %461 = vmatpush1.msra.mxu0 %v193
  %462 = vmatprep.subr.mxu0 0.0
  %463 = vmatpush1.msra.mxu0 %v192
  %464 = vmatprep.subr.mxu0 0.0
  %465 = vmatpush1.msra.mxu0 %v191
  %466 = vmatprep.subr.mxu0 0.0
  %467 = vmatpush1.msra.mxu0 %v190
  %468 = vmatprep.subr.mxu0 0.0
  %469 = vmatpush1.msra.mxu0 %v189
  %470 = vmatprep.subr.mxu0 0.0
  %471 = vmatpush1.msra.mxu0 %v188
  %472 = vmatprep.subr.mxu0 0.0
  %473 = vmatpush1.msra.mxu0 %v187
  %474 = vmatprep.subr.mxu0 0.0
  %475 = vmatpush1.msra.mxu0 %v186
  %476 = vmatprep.subr.mxu0 0.0
  %477 = vmatpush1.msra.mxu0 %v185
  %478 = vmatprep.subr.mxu0 0.0
  %479 = vmatpush1.msra.mxu0 %v184
  %480 = vmatprep.subr.mxu0 0.0
  %481 = vmatpush1.msra.mxu0 %v183
  %482 = vmatprep.subr.mxu0 0.0
  %483 = vmatpush1.msra.mxu0 %v182
  %484 = vmatprep.subr.mxu0 0.0
  %485 = vmatpush2.msra.mxu0 %v213
  %486 = vmatprep.subr.mxu0 0.0
  %487 = vmatpush2.msra.mxu0 %v212
  %488 = vmatprep.subr.mxu0 0.0
  %489 = vmatpush2.msra.mxu0 %v211
  %490 = vmatprep.subr.mxu0 0.0
  %491 = vmatpush2.msra.mxu0 %v210
  %492 = vmatprep.subr.mxu0 0.0
  %493 = vmatpush2.msra.mxu0 %v209
  %494 = vmatprep.subr.mxu0 0.0
  %495 = vmatpush2.msra.mxu0 %v208
  %496 = vmatprep.subr.mxu0 0.0
  %497 = vmatpush2.msra.mxu0 %v207
  %498 = vmatprep.subr.mxu0 0.0
  %499 = vmatpush2.msra.mxu0 %v206
  %500 = vmatprep.subr.mxu0 0.0
  %501 = vmatpush2.msra.mxu0 %v205
  %502 = vmatprep.subr.mxu0 0.0
  %503 = vmatpush2.msra.mxu0 %v204
  %504 = vmatprep.subr.mxu0 0.0
  %505 = vmatpush2.msra.mxu0 %v203
  %506 = vmatprep.subr.mxu0 0.0
  %507 = vmatpush2.msra.mxu0 %v202
  %508 = vmatprep.subr.mxu0 0.0
  %509 = vmatpush2.msra.mxu0 %v201
  %510 = vmatprep.subr.mxu0 0.0
  %511 = vmatpush2.msra.mxu0 %v200
  %512 = vmatprep.subr.mxu0 0.0
  %513 = vmatpush2.msra.mxu0 %v199
  %514 = vmatprep.subr.mxu0 0.0
  %515 = vmatpush2.msra.mxu0 %v198
  %516 = vmatprep.mubr.f32.mxu0 %v41
  %517 = vmatmul.mubr.f32.gmra.mxu0 %v40
  %v518 = vpop.f32.mrf.mxu0
  %v519 = vadd.f32 %v374, %v518
  %v520 = vpop.f32.mrf.mxu0
  %521 = vmatprep.mubr.f32.mxu0 %v48
  %522 = vmatmul.mubr.f32.gmra.mxu0 %v47
  %v523 = vpop.f32.mrf.mxu0
  %v524 = vadd.f32 %v379, %v523
  %v525 = vpop.f32.mrf.mxu0
  %526 = vmatprep.mubr.f32.mxu0 %v55
  %527 = vmatmul.mubr.f32.gmra.mxu0 %v54
  %v528 = vpop.f32.mrf.mxu0
  %v529 = vadd.f32 %v384, %v528
  %v530 = vpop.f32.mrf.mxu0
  %531 = vmatprep.mubr.f32.mxu0 %v62
  %532 = vmatmul.mubr.f32.gmra.mxu0 %v61
  %v533 = vpop.f32.mrf.mxu0
  %v534 = vadd.f32 %v389, %v533
  %v535 = vpop.f32.mrf.mxu0
  %536 = vmatprep.mubr.f32.mxu0 %v69
  %537 = vmatmul.mubr.f32.gmra.mxu0 %v68
  %v538 = vpop.f32.mrf.mxu0
  %v539 = vadd.f32 %v394, %v538
  %v540 = vpop.f32.mrf.mxu0
  %541 = vmatprep.mubr.f32.mxu0 %v76
  %542 = vmatmul.mubr.f32.gmra.mxu0 %v75
  %v543 = vpop.f32.mrf.mxu0
  %v544 = vadd.f32 %v399, %v543
  %v545 = vpop.f32.mrf.mxu0
  %546 = vmatprep.mubr.f32.mxu0 %v83
  %547 = vmatmul.mubr.f32.gmra.mxu0 %v82
  %v548 = vpop.f32.mrf.mxu0
  %v549 = vadd.f32 %v404, %v548
  %v550 = vpop.f32.mrf.mxu0
  %551 = vmatprep.mubr.f32.mxu0 %v90
  %552 = vmatmul.mubr.f32.gmra.mxu0 %v89
  %v553 = vpop.f32.mrf.mxu0
  %v554 = vadd.f32 %v409, %v553
  %v555 = vpop.f32.mrf.mxu0
  %556 = vmatprep.mubr.f32.mxu0 %v97
  %557 = vmatmul.mubr.f32.gmra.mxu0 %v96
  %v558 = vpop.f32.mrf.mxu0
  %v559 = vadd.f32 %v414, %v558
  %v560 = vpop.f32.mrf.mxu0
  %561 = vmatprep.mubr.f32.mxu0 %v104
  %562 = vmatmul.mubr.f32.gmra.mxu0 %v103
  %v563 = vpop.f32.mrf.mxu0
  %v564 = vadd.f32 %v419, %v563
  %v565 = vpop.f32.mrf.mxu0
  %566 = vmatprep.mubr.f32.mxu0 %v111
  %567 = vmatmul.mubr.f32.gmra.mxu0 %v110
  %v568 = vpop.f32.mrf.mxu0
  %v569 = vadd.f32 %v424, %v568
  %v570 = vpop.f32.mrf.mxu0
  %571 = vmatprep.mubr.f32.mxu0 %v118
  %572 = vmatmul.mubr.f32.gmra.mxu0 %v117
  %v573 = vpop.f32.mrf.mxu0
  %v574 = vadd.f32 %v429, %v573
  %v575 = vpop.f32.mrf.mxu0
  %576 = vmatprep.mubr.f32.mxu0 %v125
  %577 = vmatmul.mubr.f32.gmra.mxu0 %v124
  %v578 = vpop.f32.mrf.mxu0
  %v579 = vadd.f32 %v434, %v578
  %v580 = vpop.f32.mrf.mxu0
  %581 = vmatprep.mubr.f32.mxu0 %v132
  %582 = vmatmul.mubr.f32.gmra.mxu0 %v131
  %v583 = vpop.f32.mrf.mxu0
  %v584 = vadd.f32 %v439, %v583
  %v585 = vpop.f32.mrf.mxu0
  %586 = vmatprep.mubr.f32.mxu0 %v139
  %587 = vmatmul.mubr.f32.gmra.mxu0 %v138
  %v588 = vpop.f32.mrf.mxu0
  %v589 = vadd.f32 %v444, %v588
  %v590 = vpop.f32.mrf.mxu0
  %591 = vmatprep.mubr.f32.mxu0 %v146
  %592 = vmatmul.mubr.f32.gmra.mxu0 %v145
  %v593 = vpop.f32.mrf.mxu0
  %v594 = vadd.f32 %v449, %v593
  %v595 = vpop.f32.mrf.mxu0
  %596 = vdwg.mxu0
  %597 = vmatprep.subr.mxu0 0.0
  %598 = vmatpush1.msra.mxu0 %v229
  %599 = vmatprep.subr.mxu0 0.0
  %600 = vmatpush1.msra.mxu0 %v228
  %601 = vmatprep.subr.mxu0 0.0
  %602 = vmatpush1.msra.mxu0 %v227
  %603 = vmatprep.subr.mxu0 0.0
  %604 = vmatpush1.msra.mxu0 %v226
  %605 = vmatprep.subr.mxu0 0.0
  %606 = vmatpush1.msra.mxu0 %v225
  %607 = vmatprep.subr.mxu0 0.0
  %608 = vmatpush1.msra.mxu0 %v224
  %609 = vmatprep.subr.mxu0 0.0
  %610 = vmatpush1.msra.mxu0 %v223
  %611 = vmatprep.subr.mxu0 0.0
  %612 = vmatpush1.msra.mxu0 %v222
  %613 = vmatprep.subr.mxu0 0.0
  %614 = vmatpush1.msra.mxu0 %v221
  %615 = vmatprep.subr.mxu0 0.0
  %616 = vmatpush1.msra.mxu0 %v220
  %617 = vmatprep.subr.mxu0 0.0
  %618 = vmatpush1.msra.mxu0 %v219
  %619 = vmatprep.subr.mxu0 0.0
  %620 = vmatpush1.msra.mxu0 %v218
  %621 = vmatprep.subr.mxu0 0.0
  %622 = vmatpush1.msra.mxu0 %v217
  %623 = vmatprep.subr.mxu0 0.0
  %624 = vmatpush1.msra.mxu0 %v216
  %625 = vmatprep.subr.mxu0 0.0
  %626 = vmatpush1.msra.mxu0 %v215
  %627 = vmatprep.subr.mxu0 0.0
  %628 = vmatpush1.msra.mxu0 %v214
  %629 = vmatprep.subr.mxu0 0.0
  %630 = vmatpush2.msra.mxu0 %v245
  %631 = vmatprep.subr.mxu0 0.0
  %632 = vmatpush2.msra.mxu0 %v244
  %633 = vmatprep.subr.mxu0 0.0
  %634 = vmatpush2.msra.mxu0 %v243
  %635 = vmatprep.subr.mxu0 0.0
  %636 = vmatpush2.msra.mxu0 %v242
  %637 = vmatprep.subr.mxu0 0.0
  %638 = vmatpush2.msra.mxu0 %v241
  %639 = vmatprep.subr.mxu0 0.0
  %640 = vmatpush2.msra.mxu0 %v240
  %641 = vmatprep.subr.mxu0 0.0
  %642 = vmatpush2.msra.mxu0 %v239
  %643 = vmatprep.subr.mxu0 0.0
  %644 = vmatpush2.msra.mxu0 %v238
  %645 = vmatprep.subr.mxu0 0.0
  %646 = vmatpush2.msra.mxu0 %v237
  %647 = vmatprep.subr.mxu0 0.0
  %648 = vmatpush2.msra.mxu0 %v236
  %649 = vmatprep.subr.mxu0 0.0
  %650 = vmatpush2.msra.mxu0 %v235
  %651 = vmatprep.subr.mxu0 0.0
  %652 = vmatpush2.msra.mxu0 %v234
  %653 = vmatprep.subr.mxu0 0.0
  %654 = vmatpush2.msra.mxu0 %v233
  %655 = vmatprep.subr.mxu0 0.0
  %656 = vmatpush2.msra.mxu0 %v232
  %657 = vmatprep.subr.mxu0 0.0
  %658 = vmatpush2.msra.mxu0 %v231
  %659 = vmatprep.subr.mxu0 0.0
  %660 = vmatpush2.msra.mxu0 %v230
  %661 = vmatprep.mubr.f32.mxu0 %v43
  %662 = vmatmul.mubr.f32.gmra.mxu0 %v42
  %v663 = vpop.f32.mrf.mxu0
  %v664 = vadd.f32 %v519, %v663
  %v665 = vpop.f32.mrf.mxu0
  %666 = vmatprep.mubr.f32.mxu0 %v50
  %667 = vmatmul.mubr.f32.gmra.mxu0 %v49
  %v668 = vpop.f32.mrf.mxu0
  %v669 = vadd.f32 %v524, %v668
  %v670 = vpop.f32.mrf.mxu0
  %671 = vmatprep.mubr.f32.mxu0 %v57
  %672 = vmatmul.mubr.f32.gmra.mxu0 %v56
  %v673 = vpop.f32.mrf.mxu0
  %v674 = vadd.f32 %v529, %v673
  %v675 = vpop.f32.mrf.mxu0
  %676 = vmatprep.mubr.f32.mxu0 %v64
  %677 = vmatmul.mubr.f32.gmra.mxu0 %v63
  %v678 = vpop.f32.mrf.mxu0
  %v679 = vadd.f32 %v534, %v678
  %v680 = vpop.f32.mrf.mxu0
  %681 = vmatprep.mubr.f32.mxu0 %v71
  %682 = vmatmul.mubr.f32.gmra.mxu0 %v70
  %v683 = vpop.f32.mrf.mxu0
  %v684 = vadd.f32 %v539, %v683
  %v685 = vpop.f32.mrf.mxu0
  %686 = vmatprep.mubr.f32.mxu0 %v78
  %687 = vmatmul.mubr.f32.gmra.mxu0 %v77
  %v688 = vpop.f32.mrf.mxu0
  %v689 = vadd.f32 %v544, %v688
  %v690 = vpop.f32.mrf.mxu0
  %691 = vmatprep.mubr.f32.mxu0 %v85
  %692 = vmatmul.mubr.f32.gmra.mxu0 %v84
  %v693 = vpop.f32.mrf.mxu0
  %v694 = vadd.f32 %v549, %v693
  %v695 = vpop.f32.mrf.mxu0
  %696 = vmatprep.mubr.f32.mxu0 %v92
  %697 = vmatmul.mubr.f32.gmra.mxu0 %v91
  %v698 = vpop.f32.mrf.mxu0
  %v699 = vadd.f32 %v554, %v698
  %v700 = vpop.f32.mrf.mxu0
  %701 = vmatprep.mubr.f32.mxu0 %v99
  %702 = vmatmul.mubr.f32.gmra.mxu0 %v98
  %v703 = vpop.f32.mrf.mxu0
  %v704 = vadd.f32 %v559, %v703
  %v705 = vpop.f32.mrf.mxu0
  %706 = vmatprep.mubr.f32.mxu0 %v106
  %707 = vmatmul.mubr.f32.gmra.mxu0 %v105
  %v708 = vpop.f32.mrf.mxu0
  %v709 = vadd.f32 %v564, %v708
  %v710 = vpop.f32.mrf.mxu0
  %711 = vmatprep.mubr.f32.mxu0 %v113
  %712 = vmatmul.mubr.f32.gmra.mxu0 %v112
  %v713 = vpop.f32.mrf.mxu0
  %v714 = vadd.f32 %v569, %v713
  %v715 = vpop.f32.mrf.mxu0
  %716 = vmatprep.mubr.f32.mxu0 %v120
  %717 = vmatmul.mubr.f32.gmra.mxu0 %v119
  %v718 = vpop.f32.mrf.mxu0
  %v719 = vadd.f32 %v574, %v718
  %v720 = vpop.f32.mrf.mxu0
  %721 = vmatprep.mubr.f32.mxu0 %v127
  %722 = vmatmul.mubr.f32.gmra.mxu0 %v126
  %v723 = vpop.f32.mrf.mxu0
  %v724 = vadd.f32 %v579, %v723
  %v725 = vpop.f32.mrf.mxu0
  %726 = vmatprep.mubr.f32.mxu0 %v134
  %727 = vmatmul.mubr.f32.gmra.mxu0 %v133
  %v728 = vpop.f32.mrf.mxu0
  %v729 = vadd.f32 %v584, %v728
  %v730 = vpop.f32.mrf.mxu0
  %731 = vmatprep.mubr.f32.mxu0 %v141
  %732 = vmatmul.mubr.f32.gmra.mxu0 %v140
  %v733 = vpop.f32.mrf.mxu0
  %v734 = vadd.f32 %v589, %v733
  %v735 = vpop.f32.mrf.mxu0
  %736 = vmatprep.mubr.f32.mxu0 %v148
  %737 = vmatmul.mubr.f32.gmra.mxu0 %v147
  %v738 = vpop.f32.mrf.mxu0
  %v739 = vadd.f32 %v594, %v738
  %v740 = vpop.f32.mrf.mxu0
  %741 = vdwg.mxu0
  %742 = vmatprep.subr.mxu0 0.0
  %743 = vmatpush1.msra.mxu0 0.0
  %744 = vmatprep.subr.mxu0 0.0
  %745 = vmatpush1.msra.mxu0 0.0
  %746 = vmatprep.subr.mxu0 0.0
  %747 = vmatpush1.msra.mxu0 0.0
  %748 = vmatprep.subr.mxu0 0.0
  %749 = vmatpush1.msra.mxu0 0.0
  %750 = vmatprep.subr.mxu0 0.0
  %751 = vmatpush1.msra.mxu0 %v257
  %752 = vmatprep.subr.mxu0 0.0
  %753 = vmatpush1.msra.mxu0 %v256
  %754 = vmatprep.subr.mxu0 0.0
  %755 = vmatpush1.msra.mxu0 %v255
  %756 = vmatprep.subr.mxu0 0.0
  %757 = vmatpush1.msra.mxu0 %v254
  %758 = vmatprep.subr.mxu0 0.0
  %759 = vmatpush1.msra.mxu0 %v253
  %760 = vmatprep.subr.mxu0 0.0
  %761 = vmatpush1.msra.mxu0 %v252
  %762 = vmatprep.subr.mxu0 0.0
  %763 = vmatpush1.msra.mxu0 %v251
  %764 = vmatprep.subr.mxu0 0.0
  %765 = vmatpush1.msra.mxu0 %v250
  %766 = vmatprep.subr.mxu0 0.0
  %767 = vmatpush1.msra.mxu0 %v249
  %768 = vmatprep.subr.mxu0 0.0
  %769 = vmatpush1.msra.mxu0 %v248
  %770 = vmatprep.subr.mxu0 0.0
  %771 = vmatpush1.msra.mxu0 %v247
  %772 = vmatprep.subr.mxu0 0.0
  %773 = vmatpush1.msra.mxu0 %v246
  %774 = vmatprep.subr.mxu0 0.0
  %775 = vmatpush2.msra.mxu0 0.0
  %776 = vmatprep.subr.mxu0 0.0
  %777 = vmatpush2.msra.mxu0 0.0
  %778 = vmatprep.subr.mxu0 0.0
  %779 = vmatpush2.msra.mxu0 0.0
  %780 = vmatprep.subr.mxu0 0.0
  %781 = vmatpush2.msra.mxu0 0.0
  %782 = vmatprep.subr.mxu0 0.0
  %783 = vmatpush2.msra.mxu0 0.0
  %784 = vmatprep.subr.mxu0 0.0
  %785 = vmatpush2.msra.mxu0 0.0
  %786 = vmatprep.subr.mxu0 0.0
  %787 = vmatpush2.msra.mxu0 0.0
  %788 = vmatprep.subr.mxu0 0.0
  %789 = vmatpush2.msra.mxu0 0.0
  %790 = vmatprep.subr.mxu0 0.0
  %791 = vmatpush2.msra.mxu0 0.0
  %792 = vmatprep.subr.mxu0 0.0
  %793 = vmatpush2.msra.mxu0 0.0
  %794 = vmatprep.subr.mxu0 0.0
  %795 = vmatpush2.msra.mxu0 0.0
  %796 = vmatprep.subr.mxu0 0.0
  %797 = vmatpush2.msra.mxu0 0.0
  %798 = vmatprep.subr.mxu0 0.0
  %799 = vmatpush2.msra.mxu0 0.0
  %800 = vmatprep.subr.mxu0 0.0
  %801 = vmatpush2.msra.mxu0 0.0
  %802 = vmatprep.subr.mxu0 0.0
  %803 = vmatpush2.msra.mxu0 0.0
  %804 = vmatprep.subr.mxu0 0.0
  %805 = vmatpush2.msra.mxu0 0.0
  %806 = vmatprep.mubr.f32.mxu0 0.0
  %807 = vmatmul.mubr.f32.gmra.mxu0 %v260
  %v808 = vpop.f32.mrf.mxu0
  %v809 = vadd.f32 %v664, %v808
  %v810 = vpop.f32.mrf.mxu0
  %811 = vmatprep.mubr.f32.mxu0 0.0
  %812 = vmatmul.mubr.f32.gmra.mxu0 %v263
  %v813 = vpop.f32.mrf.mxu0
  %v814 = vadd.f32 %v669, %v813
  %v815 = vpop.f32.mrf.mxu0
  %816 = vmatprep.mubr.f32.mxu0 0.0
  %817 = vmatmul.mubr.f32.gmra.mxu0 %v266
  %v818 = vpop.f32.mrf.mxu0
  %v819 = vadd.f32 %v674, %v818
  %v820 = vpop.f32.mrf.mxu0
  %821 = vmatprep.mubr.f32.mxu0 0.0
  %822 = vmatmul.mubr.f32.gmra.mxu0 %v269
  %v823 = vpop.f32.mrf.mxu0
  %v824 = vadd.f32 %v679, %v823
  %v825 = vpop.f32.mrf.mxu0
  %826 = vmatprep.mubr.f32.mxu0 0.0
  %827 = vmatmul.mubr.f32.gmra.mxu0 %v272
  %v828 = vpop.f32.mrf.mxu0
  %v829 = vadd.f32 %v684, %v828
  %v830 = vpop.f32.mrf.mxu0
  %831 = vmatprep.mubr.f32.mxu0 0.0
  %832 = vmatmul.mubr.f32.gmra.mxu0 %v275
  %v833 = vpop.f32.mrf.mxu0
  %v834 = vadd.f32 %v689, %v833
  %v835 = vpop.f32.mrf.mxu0
  %836 = vmatprep.mubr.f32.mxu0 0.0
  %837 = vmatmul.mubr.f32.gmra.mxu0 %v278
  %v838 = vpop.f32.mrf.mxu0
  %v839 = vadd.f32 %v694, %v838
  %v840 = vpop.f32.mrf.mxu0
  %841 = vmatprep.mubr.f32.mxu0 0.0
  %842 = vmatmul.mubr.f32.gmra.mxu0 %v281
  %v843 = vpop.f32.mrf.mxu0
  %v844 = vadd.f32 %v699, %v843
  %v845 = vpop.f32.mrf.mxu0
  %846 = vmatprep.mubr.f32.mxu0 0.0
  %847 = vmatmul.mubr.f32.gmra.mxu0 %v284
  %v848 = vpop.f32.mrf.mxu0
  %v849 = vadd.f32 %v704, %v848
  %v850 = vpop.f32.mrf.mxu0
  %851 = vmatprep.mubr.f32.mxu0 0.0
  %852 = vmatmul.mubr.f32.gmra.mxu0 %v287
  %v853 = vpop.f32.mrf.mxu0
  %v854 = vadd.f32 %v709, %v853
  %v855 = vpop.f32.mrf.mxu0
  %856 = vmatprep.mubr.f32.mxu0 0.0
  %857 = vmatmul.mubr.f32.gmra.mxu0 %v290
  %v858 = vpop.f32.mrf.mxu0
  %v859 = vadd.f32 %v714, %v858
  %v860 = vpop.f32.mrf.mxu0
  %861 = vmatprep.mubr.f32.mxu0 0.0
  %862 = vmatmul.mubr.f32.gmra.mxu0 %v293
  %v863 = vpop.f32.mrf.mxu0
  %v864 = vadd.f32 %v719, %v863
  %v865 = vpop.f32.mrf.mxu0
  %866 = vmatprep.mubr.f32.mxu0 0.0
  %867 = vmatmul.mubr.f32.gmra.mxu0 %v296
  %v868 = vpop.f32.mrf.mxu0
  %v869 = vadd.f32 %v724, %v868
  %v870 = vpop.f32.mrf.mxu0
  %871 = vmatprep.mubr.f32.mxu0 0.0
  %872 = vmatmul.mubr.f32.gmra.mxu0 %v299
  %v873 = vpop.f32.mrf.mxu0
  %v874 = vadd.f32 %v729, %v873
  %v875 = vpop.f32.mrf.mxu0
  %876 = vmatprep.mubr.f32.mxu0 0.0
  %877 = vmatmul.mubr.f32.gmra.mxu0 %v302
  %v878 = vpop.f32.mrf.mxu0
  %v879 = vadd.f32 %v734, %v878
  %v880 = vpop.f32.mrf.mxu0
  %881 = vmatprep.mubr.f32.mxu0 0.0
  %882 = vmatmul.mubr.f32.gmra.mxu0 %v305
  %v883 = vpop.f32.mrf.mxu0
  %v884 = vadd.f32 %v739, %v883
  %v885 = vpop.f32.mrf.mxu0
  %886 = vdwg.mxu0
  %v887 = vld [vmem:[%s3] sm:$0x1]
  %v889 = vlaneseq
  %v890 = vshrl.u32 %v889, 7
  %v891 = vsub.s32 0, %v890
  %v892 = vrot.slane %v887, %v891
  %v894 = vmul.f32 %v809, %v892
  %v895 = vmul.f32 %v814, %v892
  %v896 = vmul.f32 %v819, %v892
  %v897 = vmul.f32 %v824, %v892
  %v898 = vmul.f32 %v829, %v892
  %v899 = vmul.f32 %v834, %v892
  %v900 = vmul.f32 %v839, %v892
  %v901 = vmul.f32 %v844, %v892
  %v902 = vmul.f32 %v849, %v892
  %v903 = vmul.f32 %v854, %v892
  %v904 = vmul.f32 %v859, %v892
  %v905 = vmul.f32 %v864, %v892
  %v906 = vmul.f32 %v869, %v892
  %v907 = vmul.f32 %v874, %v892
  %v908 = vmul.f32 %v879, %v892
  %v909 = vmul.f32 %v884, %v892
  %v910 = vld [vmem:[%s4] sm:$0x1]
  %v912 = vlaneseq
  %v913 = vshrl.u32 %v912, 7
  %v914 = vsub.s32 0, %v913
  %v915 = vrot.slane %v910, %v914
  %v917 = vadd.f32 %v894, %v915
  %v918 = vadd.f32 %v895, %v915
  %v919 = vadd.f32 %v896, %v915
  %v920 = vadd.f32 %v897, %v915
  %v921 = vadd.f32 %v898, %v915
  %v922 = vadd.f32 %v899, %v915
  %v923 = vadd.f32 %v900, %v915
  %v924 = vadd.f32 %v901, %v915
  %v925 = vadd.f32 %v902, %v915
  %v926 = vadd.f32 %v903, %v915
  %v927 = vadd.f32 %v904, %v915
  %v928 = vadd.f32 %v905, %v915
  %v929 = vadd.f32 %v906, %v915
  %v930 = vadd.f32 %v907, %v915
  %v931 = vadd.f32 %v908, %v915
  %v932 = vadd.f32 %v909, %v915
  %v933 = vld [vmem:[%s5] sm:$0xff]
  %v934 = vld [vmem:[%s5 + $0x8] sm:$0xff]
  %v935 = vld [vmem:[%s5 + $0x10] sm:$0xff]
  %v936 = vld [vmem:[%s5 + $0x18] sm:$0xff]
  %vm937 = vcmask 261120
  %v939 = vsel %vm937, %v917, 0
  %v942 = vsel %vm937, %v918, 0
  %v945 = vsel %vm937, %v919, 0
  %v948 = vsel %vm937, %v920, 0
  %v951 = vsel %vm937, %v921, 0
  %v954 = vsel %vm937, %v922, 0
  %v957 = vsel %vm937, %v923, 0
  %v960 = vsel %vm937, %v924, 0
  %v963 = vsel %vm937, %v925, 0
  %v966 = vsel %vm937, %v926, 0
  %v969 = vsel %vm937, %v927, 0
  %v972 = vsel %vm937, %v928, 0
  %v975 = vsel %vm937, %v929, 0
  %v978 = vsel %vm937, %v930, 0
  %v981 = vsel %vm937, %v931, 0
  %v984 = vsel %vm937, %v932, 0
  %986 = vmatprep.subr.mxu0 0.0
  %987 = vmatpush1.msra.mxu0 0.0
  %988 = vmatprep.subr.mxu0 0.0
  %989 = vmatpush1.msra.mxu0 0.0
  %990 = vmatprep.subr.mxu0 0.0
  %991 = vmatpush1.msra.mxu0 0.0
  %992 = vmatprep.subr.mxu0 0.0
  %993 = vmatpush1.msra.mxu0 0.0
  %994 = vmatprep.subr.mxu0 0.0
  %995 = vmatpush1.msra.mxu0 0.0
  %996 = vmatprep.subr.mxu0 0.0
  %997 = vmatpush1.msra.mxu0 0.0
  %998 = vmatprep.subr.mxu0 0.0
  %999 = vmatpush1.msra.mxu0 0.0
  %1000 = vmatprep.subr.mxu0 0.0
  %1001 = vmatpush1.msra.mxu0 0.0
  %1002 = vmatprep.subr.mxu0 0.0
  %1003 = vmatpush1.msra.mxu0 0.0
  %1004 = vmatprep.subr.mxu0 0.0
  %1005 = vmatpush1.msra.mxu0 0.0
  %1006 = vmatprep.subr.mxu0 0.0
  %1007 = vmatpush1.msra.mxu0 0.0
  %1008 = vmatprep.subr.mxu0 0.0
  %1009 = vmatpush1.msra.mxu0 0.0
  %1010 = vmatprep.subr.mxu0 0.0
  %1011 = vmatpush1.msra.mxu0 %v936
  %1012 = vmatprep.subr.mxu0 0.0
  %1013 = vmatpush1.msra.mxu0 %v935
  %1014 = vmatprep.subr.mxu0 0.0
  %1015 = vmatpush1.msra.mxu0 %v934
  %1016 = vmatprep.subr.mxu0 0.0
  %1017 = vmatpush1.msra.mxu0 %v933
  %1018 = vmatprep.subr.mxu0 0.0
  %1019 = vmatpush2.msra.mxu0 0.0
  %1020 = vmatprep.subr.mxu0 0.0
  %1021 = vmatpush2.msra.mxu0 0.0
  %1022 = vmatprep.subr.mxu0 0.0
  %1023 = vmatpush2.msra.mxu0 0.0
  %1024 = vmatprep.subr.mxu0 0.0
  %1025 = vmatpush2.msra.mxu0 0.0
  %1026 = vmatprep.subr.mxu0 0.0
  %1027 = vmatpush2.msra.mxu0 0.0
  %1028 = vmatprep.subr.mxu0 0.0
  %1029 = vmatpush2.msra.mxu0 0.0
  %1030 = vmatprep.subr.mxu0 0.0
  %1031 = vmatpush2.msra.mxu0 0.0
  %1032 = vmatprep.subr.mxu0 0.0
  %1033 = vmatpush2.msra.mxu0 0.0
  %1034 = vmatprep.subr.mxu0 0.0
  %1035 = vmatpush2.msra.mxu0 0.0
  %1036 = vmatprep.subr.mxu0 0.0
  %1037 = vmatpush2.msra.mxu0 0.0
  %1038 = vmatprep.subr.mxu0 0.0
  %1039 = vmatpush2.msra.mxu0 0.0
  %1040 = vmatprep.subr.mxu0 0.0
  %1041 = vmatpush2.msra.mxu0 0.0
  %1042 = vmatprep.subr.mxu0 0.0
  %1043 = vmatpush2.msra.mxu0 0.0
  %1044 = vmatprep.subr.mxu0 0.0
  %1045 = vmatpush2.msra.mxu0 0.0
  %1046 = vmatprep.subr.mxu0 0.0
  %1047 = vmatpush2.msra.mxu0 0.0
  %1048 = vmatprep.subr.mxu0 0.0
  %1049 = vmatpush2.msra.mxu0 0.0
  %1050 = vmatprep.mubr.f32.mxu0 0.0
  %1051 = vmatmul.mubr.f32.gmra.mxu0 %v939
  %v1052 = vpop.f32.mrf.mxu0
  %v1053 = vadd.f32 0.0, %v1052
  %v1054 = vpop.f32.mrf.mxu0
  %1055 = vmatprep.mubr.f32.mxu0 0.0
  %1056 = vmatmul.mubr.f32.gmra.mxu0 %v942
  %v1057 = vpop.f32.mrf.mxu0
  %v1058 = vadd.f32 0.0, %v1057
  %v1059 = vpop.f32.mrf.mxu0
  %1060 = vmatprep.mubr.f32.mxu0 0.0
  %1061 = vmatmul.mubr.f32.gmra.mxu0 %v945
  %v1062 = vpop.f32.mrf.mxu0
  %v1063 = vadd.f32 0.0, %v1062
  %v1064 = vpop.f32.mrf.mxu0
  %1065 = vmatprep.mubr.f32.mxu0 0.0
  %1066 = vmatmul.mubr.f32.gmra.mxu0 %v948
  %v1067 = vpop.f32.mrf.mxu0
  %v1068 = vadd.f32 0.0, %v1067
  %v1069 = vpop.f32.mrf.mxu0
  %1070 = vmatprep.mubr.f32.mxu0 0.0
  %1071 = vmatmul.mubr.f32.gmra.mxu0 %v951
  %v1072 = vpop.f32.mrf.mxu0
  %v1073 = vadd.f32 0.0, %v1072
  %v1074 = vpop.f32.mrf.mxu0
  %1075 = vmatprep.mubr.f32.mxu0 0.0
  %1076 = vmatmul.mubr.f32.gmra.mxu0 %v954
  %v1077 = vpop.f32.mrf.mxu0
  %v1078 = vadd.f32 0.0, %v1077
  %v1079 = vpop.f32.mrf.mxu0
  %1080 = vmatprep.mubr.f32.mxu0 0.0
  %1081 = vmatmul.mubr.f32.gmra.mxu0 %v957
  %v1082 = vpop.f32.mrf.mxu0
  %v1083 = vadd.f32 0.0, %v1082
  %v1084 = vpop.f32.mrf.mxu0
  %1085 = vmatprep.mubr.f32.mxu0 0.0
  %1086 = vmatmul.mubr.f32.gmra.mxu0 %v960
  %v1087 = vpop.f32.mrf.mxu0
  %v1088 = vadd.f32 0.0, %v1087
  %v1089 = vpop.f32.mrf.mxu0
  %1090 = vmatprep.mubr.f32.mxu0 0.0
  %1091 = vmatmul.mubr.f32.gmra.mxu0 %v963
  %v1092 = vpop.f32.mrf.mxu0
  %v1093 = vadd.f32 0.0, %v1092
  %v1094 = vpop.f32.mrf.mxu0
  %1095 = vmatprep.mubr.f32.mxu0 0.0
  %1096 = vmatmul.mubr.f32.gmra.mxu0 %v966
  %v1097 = vpop.f32.mrf.mxu0
  %v1098 = vadd.f32 0.0, %v1097
  %v1099 = vpop.f32.mrf.mxu0
  %1100 = vmatprep.mubr.f32.mxu0 0.0
  %1101 = vmatmul.mubr.f32.gmra.mxu0 %v969
  %v1102 = vpop.f32.mrf.mxu0
  %v1103 = vadd.f32 0.0, %v1102
  %v1104 = vpop.f32.mrf.mxu0
  %1105 = vmatprep.mubr.f32.mxu0 0.0
  %1106 = vmatmul.mubr.f32.gmra.mxu0 %v972
  %v1107 = vpop.f32.mrf.mxu0
  %v1108 = vadd.f32 0.0, %v1107
  %v1109 = vpop.f32.mrf.mxu0
  %1110 = vmatprep.mubr.f32.mxu0 0.0
  %1111 = vmatmul.mubr.f32.gmra.mxu0 %v975
  %v1112 = vpop.f32.mrf.mxu0
  %v1113 = vadd.f32 0.0, %v1112
  %v1114 = vpop.f32.mrf.mxu0
  %1115 = vmatprep.mubr.f32.mxu0 0.0
  %1116 = vmatmul.mubr.f32.gmra.mxu0 %v978
  %v1117 = vpop.f32.mrf.mxu0
  %v1118 = vadd.f32 0.0, %v1117
  %v1119 = vpop.f32.mrf.mxu0
  %1120 = vmatprep.mubr.f32.mxu0 0.0
  %1121 = vmatmul.mubr.f32.gmra.mxu0 %v981
  %v1122 = vpop.f32.mrf.mxu0
  %v1123 = vadd.f32 0.0, %v1122
  %v1124 = vpop.f32.mrf.mxu0
  %1125 = vmatprep.mubr.f32.mxu0 0.0
  %1126 = vmatmul.mubr.f32.gmra.mxu0 %v984
  %v1127 = vpop.f32.mrf.mxu0
  %v1128 = vadd.f32 0.0, %v1127
  %v1129 = vpop.f32.mrf.mxu0
  %1130 = vdwg.mxu0
  %v1131 = vld [vmem:[%s6] sm:$0x1]
  %v1133 = vlaneseq
  %v1134 = vshrl.u32 %v1133, 7
  %v1135 = vsub.s32 0, %v1134
  %v1136 = vrot.slane %v1131, %v1135
  %v1138 = vmul.f32 %v1053, %v1136
  %v1139 = vmul.f32 %v1058, %v1136
  %v1140 = vmul.f32 %v1063, %v1136
  %v1141 = vmul.f32 %v1068, %v1136
  %v1142 = vmul.f32 %v1073, %v1136
  %v1143 = vmul.f32 %v1078, %v1136
  %v1144 = vmul.f32 %v1083, %v1136
  %v1145 = vmul.f32 %v1088, %v1136
  %v1146 = vmul.f32 %v1093, %v1136
  %v1147 = vmul.f32 %v1098, %v1136
  %v1148 = vmul.f32 %v1103, %v1136
  %v1149 = vmul.f32 %v1108, %v1136
  %v1150 = vmul.f32 %v1113, %v1136
  %v1151 = vmul.f32 %v1118, %v1136
  %v1152 = vmul.f32 %v1123, %v1136
  %v1153 = vmul.f32 %v1128, %v1136
  %v1154 = vld [vmem:[%s7] sm:$0x1]
  %v1156 = vlaneseq
  %v1157 = vshrl.u32 %v1156, 7
  %v1158 = vsub.s32 0, %v1157
  %v1159 = vrot.slane %v1154, %v1158
  %v1161 = vadd.f32 %v1138, %v1159
  %v1162 = vadd.f32 %v1139, %v1159
  %v1163 = vadd.f32 %v1140, %v1159
  %v1164 = vadd.f32 %v1141, %v1159
  %v1165 = vadd.f32 %v1142, %v1159
  %v1166 = vadd.f32 %v1143, %v1159
  %v1167 = vadd.f32 %v1144, %v1159
  %v1168 = vadd.f32 %v1145, %v1159
  %v1169 = vadd.f32 %v1146, %v1159
  %v1170 = vadd.f32 %v1147, %v1159
  %v1171 = vadd.f32 %v1148, %v1159
  %v1172 = vadd.f32 %v1149, %v1159
  %v1173 = vadd.f32 %v1150, %v1159
  %v1174 = vadd.f32 %v1151, %v1159
  %v1175 = vadd.f32 %v1152, %v1159
  %v1176 = vadd.f32 %v1153, %v1159
  %v1177 = vld [vmem:[%s1] sm:$0xff]
  %v1178 = vld [vmem:[%s1 + $0x8] sm:$0xff]
  %v1179 = vld [vmem:[%s1 + $0x10] sm:$0xff]
  %v1180 = vld [vmem:[%s1 + $0x18] sm:$0xff]
  %v1181 = vld [vmem:[%s1 + $0x20] sm:$0xff]
  %v1182 = vld [vmem:[%s1 + $0x28] sm:$0xff]
  %v1183 = vld [vmem:[%s1 + $0x30] sm:$0xff]
  %v1184 = vld [vmem:[%s1 + $0x38] sm:$0xff]
  %v1185 = vld [vmem:[%s1 + $0x40] sm:$0xff]
  %v1186 = vld [vmem:[%s1 + $0x48] sm:$0xff]
  %v1187 = vld [vmem:[%s1 + $0x50] sm:$0xff]
  %v1188 = vld [vmem:[%s1 + $0x58] sm:$0xff]
  %v1189 = vld [vmem:[%s1 + $0x60] sm:$0xff]
  %v1190 = vld [vmem:[%s1 + $0x68] sm:$0xff]
  %v1191 = vld [vmem:[%s1 + $0x70] sm:$0xff]
  %v1192 = vld [vmem:[%s1 + $0x78] sm:$0xff]
  %v1193 = vld [vmem:[%s8] sm:$0xff]
  %v1194 = vld [vmem:[%s8 + $0x8] sm:$0xff]
  %v1195 = vld [vmem:[%s8 + $0x10] sm:$0xff]
  %v1196 = vld [vmem:[%s8 + $0x18] sm:$0xff]
  %v1197 = vld [vmem:[%s8 + $0x20] sm:$0xff]
  %v1198 = vld [vmem:[%s8 + $0x28] sm:$0xff]
  %v1199 = vld [vmem:[%s8 + $0x30] sm:$0xff]
  %v1200 = vld [vmem:[%s8 + $0x38] sm:$0xff]
  %vm1201 = vcmask 523264
  %v1203 = vsel %vm1201, %v1177, 0
  %v1206 = vsel %vm1201, %v1178, 0
  %v1209 = vsel %vm1201, %v1179, 0
  %v1212 = vsel %vm1201, %v1180, 0
  %v1215 = vsel %vm1201, %v1181, 0
  %v1218 = vsel %vm1201, %v1182, 0
  %v1221 = vsel %vm1201, %v1183, 0
  %v1224 = vsel %vm1201, %v1184, 0
  %v1227 = vsel %vm1201, %v1185, 0
  %v1230 = vsel %vm1201, %v1186, 0
  %v1233 = vsel %vm1201, %v1187, 0
  %v1236 = vsel %vm1201, %v1188, 0
  %v1239 = vsel %vm1201, %v1189, 0
  %v1242 = vsel %vm1201, %v1190, 0
  %v1245 = vsel %vm1201, %v1191, 0
  %v1248 = vsel %vm1201, %v1192, 0
  %1250 = vmatprep.subr.mxu0 0.0
  %1251 = vmatpush1.msra.mxu0 0.0
  %1252 = vmatprep.subr.mxu0 0.0
  %1253 = vmatpush1.msra.mxu0 0.0
  %1254 = vmatprep.subr.mxu0 0.0
  %1255 = vmatpush1.msra.mxu0 0.0
  %1256 = vmatprep.subr.mxu0 0.0
  %1257 = vmatpush1.msra.mxu0 0.0
  %1258 = vmatprep.subr.mxu0 0.0
  %1259 = vmatpush1.msra.mxu0 0.0
  %1260 = vmatprep.subr.mxu0 0.0
  %1261 = vmatpush1.msra.mxu0 0.0
  %1262 = vmatprep.subr.mxu0 0.0
  %1263 = vmatpush1.msra.mxu0 0.0
  %1264 = vmatprep.subr.mxu0 0.0
  %1265 = vmatpush1.msra.mxu0 0.0
  %1266 = vmatprep.subr.mxu0 0.0
  %1267 = vmatpush1.msra.mxu0 %v1200
  %1268 = vmatprep.subr.mxu0 0.0
  %1269 = vmatpush1.msra.mxu0 %v1199
  %1270 = vmatprep.subr.mxu0 0.0
  %1271 = vmatpush1.msra.mxu0 %v1198
  %1272 = vmatprep.subr.mxu0 0.0
  %1273 = vmatpush1.msra.mxu0 %v1197
  %1274 = vmatprep.subr.mxu0 0.0
  %1275 = vmatpush1.msra.mxu0 %v1196
  %1276 = vmatprep.subr.mxu0 0.0
  %1277 = vmatpush1.msra.mxu0 %v1195
  %1278 = vmatprep.subr.mxu0 0.0
  %1279 = vmatpush1.msra.mxu0 %v1194
  %1280 = vmatprep.subr.mxu0 0.0
  %1281 = vmatpush1.msra.mxu0 %v1193
  %1282 = vmatprep.subr.mxu0 0.0
  %1283 = vmatpush2.msra.mxu0 0.0
  %1284 = vmatprep.subr.mxu0 0.0
  %1285 = vmatpush2.msra.mxu0 0.0
  %1286 = vmatprep.subr.mxu0 0.0
  %1287 = vmatpush2.msra.mxu0 0.0
  %1288 = vmatprep.subr.mxu0 0.0
  %1289 = vmatpush2.msra.mxu0 0.0
  %1290 = vmatprep.subr.mxu0 0.0
  %1291 = vmatpush2.msra.mxu0 0.0
  %1292 = vmatprep.subr.mxu0 0.0
  %1293 = vmatpush2.msra.mxu0 0.0
  %1294 = vmatprep.subr.mxu0 0.0
  %1295 = vmatpush2.msra.mxu0 0.0
  %1296 = vmatprep.subr.mxu0 0.0
  %1297 = vmatpush2.msra.mxu0 0.0
  %1298 = vmatprep.subr.mxu0 0.0
  %1299 = vmatpush2.msra.mxu0 0.0
  %1300 = vmatprep.subr.mxu0 0.0
  %1301 = vmatpush2.msra.mxu0 0.0
  %1302 = vmatprep.subr.mxu0 0.0
  %1303 = vmatpush2.msra.mxu0 0.0
  %1304 = vmatprep.subr.mxu0 0.0
  %1305 = vmatpush2.msra.mxu0 0.0
  %1306 = vmatprep.subr.mxu0 0.0
  %1307 = vmatpush2.msra.mxu0 0.0
  %1308 = vmatprep.subr.mxu0 0.0
  %1309 = vmatpush2.msra.mxu0 0.0
  %1310 = vmatprep.subr.mxu0 0.0
  %1311 = vmatpush2.msra.mxu0 0.0
  %1312 = vmatprep.subr.mxu0 0.0
  %1313 = vmatpush2.msra.mxu0 0.0
  %1314 = vmatprep.mubr.f32.mxu0 0.0
  %1315 = vmatmul.mubr.f32.gmra.mxu0 %v1203
  %v1316 = vpop.f32.mrf.mxu0
  %v1317 = vadd.f32 0.0, %v1316
  %v1318 = vpop.f32.mrf.mxu0
  %1319 = vmatprep.mubr.f32.mxu0 0.0
  %1320 = vmatmul.mubr.f32.gmra.mxu0 %v1206
  %v1321 = vpop.f32.mrf.mxu0
  %v1322 = vadd.f32 0.0, %v1321
  %v1323 = vpop.f32.mrf.mxu0
  %1324 = vmatprep.mubr.f32.mxu0 0.0
  %1325 = vmatmul.mubr.f32.gmra.mxu0 %v1209
  %v1326 = vpop.f32.mrf.mxu0
  %v1327 = vadd.f32 0.0, %v1326
  %v1328 = vpop.f32.mrf.mxu0
  %1329 = vmatprep.mubr.f32.mxu0 0.0
  %1330 = vmatmul.mubr.f32.gmra.mxu0 %v1212
  %v1331 = vpop.f32.mrf.mxu0
  %v1332 = vadd.f32 0.0, %v1331
  %v1333 = vpop.f32.mrf.mxu0
  %1334 = vmatprep.mubr.f32.mxu0 0.0
  %1335 = vmatmul.mubr.f32.gmra.mxu0 %v1215
  %v1336 = vpop.f32.mrf.mxu0
  %v1337 = vadd.f32 0.0, %v1336
  %v1338 = vpop.f32.mrf.mxu0
  %1339 = vmatprep.mubr.f32.mxu0 0.0
  %1340 = vmatmul.mubr.f32.gmra.mxu0 %v1218
  %v1341 = vpop.f32.mrf.mxu0
  %v1342 = vadd.f32 0.0, %v1341
  %v1343 = vpop.f32.mrf.mxu0
  %1344 = vmatprep.mubr.f32.mxu0 0.0
  %1345 = vmatmul.mubr.f32.gmra.mxu0 %v1221
  %v1346 = vpop.f32.mrf.mxu0
  %v1347 = vadd.f32 0.0, %v1346
  %v1348 = vpop.f32.mrf.mxu0
  %1349 = vmatprep.mubr.f32.mxu0 0.0
  %1350 = vmatmul.mubr.f32.gmra.mxu0 %v1224
  %v1351 = vpop.f32.mrf.mxu0
  %v1352 = vadd.f32 0.0, %v1351
  %v1353 = vpop.f32.mrf.mxu0
  %1354 = vmatprep.mubr.f32.mxu0 0.0
  %1355 = vmatmul.mubr.f32.gmra.mxu0 %v1227
  %v1356 = vpop.f32.mrf.mxu0
  %v1357 = vadd.f32 0.0, %v1356
  %v1358 = vpop.f32.mrf.mxu0
  %1359 = vmatprep.mubr.f32.mxu0 0.0
  %1360 = vmatmul.mubr.f32.gmra.mxu0 %v1230
  %v1361 = vpop.f32.mrf.mxu0
  %v1362 = vadd.f32 0.0, %v1361
  %v1363 = vpop.f32.mrf.mxu0
  %1364 = vmatprep.mubr.f32.mxu0 0.0
  %1365 = vmatmul.mubr.f32.gmra.mxu0 %v1233
  %v1366 = vpop.f32.mrf.mxu0
  %v1367 = vadd.f32 0.0, %v1366
  %v1368 = vpop.f32.mrf.mxu0
  %1369 = vmatprep.mubr.f32.mxu0 0.0
  %1370 = vmatmul.mubr.f32.gmra.mxu0 %v1236
  %v1371 = vpop.f32.mrf.mxu0
  %v1372 = vadd.f32 0.0, %v1371
  %v1373 = vpop.f32.mrf.mxu0
  %1374 = vmatprep.mubr.f32.mxu0 0.0
  %1375 = vmatmul.mubr.f32.gmra.mxu0 %v1239
  %v1376 = vpop.f32.mrf.mxu0
  %v1377 = vadd.f32 0.0, %v1376
  %v1378 = vpop.f32.mrf.mxu0
  %1379 = vmatprep.mubr.f32.mxu0 0.0
  %1380 = vmatmul.mubr.f32.gmra.mxu0 %v1242
  %v1381 = vpop.f32.mrf.mxu0
  %v1382 = vadd.f32 0.0, %v1381
  %v1383 = vpop.f32.mrf.mxu0
  %1384 = vmatprep.mubr.f32.mxu0 0.0
  %1385 = vmatmul.mubr.f32.gmra.mxu0 %v1245
  %v1386 = vpop.f32.mrf.mxu0
  %v1387 = vadd.f32 0.0, %v1386
  %v1388 = vpop.f32.mrf.mxu0
  %1389 = vmatprep.mubr.f32.mxu0 0.0
  %1390 = vmatmul.mubr.f32.gmra.mxu0 %v1248
  %v1391 = vpop.f32.mrf.mxu0
  %v1392 = vadd.f32 0.0, %v1391
  %v1393 = vpop.f32.mrf.mxu0
  %1394 = vdwg.mxu0
  %v1395 = vld [vmem:[%s9] sm:$0x1]
  %v1397 = vlaneseq
  %v1398 = vshrl.u32 %v1397, 7
  %v1399 = vsub.s32 0, %v1398
  %v1400 = vrot.slane %v1395, %v1399
  %v1402 = vmul.f32 %v1317, %v1400
  %v1403 = vmul.f32 %v1322, %v1400
  %v1404 = vmul.f32 %v1327, %v1400
  %v1405 = vmul.f32 %v1332, %v1400
  %v1406 = vmul.f32 %v1337, %v1400
  %v1407 = vmul.f32 %v1342, %v1400
  %v1408 = vmul.f32 %v1347, %v1400
  %v1409 = vmul.f32 %v1352, %v1400
  %v1410 = vmul.f32 %v1357, %v1400
  %v1411 = vmul.f32 %v1362, %v1400
  %v1412 = vmul.f32 %v1367, %v1400
  %v1413 = vmul.f32 %v1372, %v1400
  %v1414 = vmul.f32 %v1377, %v1400
  %v1415 = vmul.f32 %v1382, %v1400
  %v1416 = vmul.f32 %v1387, %v1400
  %v1417 = vmul.f32 %v1392, %v1400
  %v1418 = vld [vmem:[%s10] sm:$0x1]
  %v1420 = vlaneseq
  %v1421 = vshrl.u32 %v1420, 7
  %v1422 = vsub.s32 0, %v1421
  %v1423 = vrot.slane %v1418, %v1422
  %v1425 = vadd.f32 %v1402, %v1423
  %v1426 = vadd.f32 %v1403, %v1423
  %v1427 = vadd.f32 %v1404, %v1423
  %v1428 = vadd.f32 %v1405, %v1423
  %v1429 = vadd.f32 %v1406, %v1423
  %v1430 = vadd.f32 %v1407, %v1423
  %v1431 = vadd.f32 %v1408, %v1423
  %v1432 = vadd.f32 %v1409, %v1423
  %v1433 = vadd.f32 %v1410, %v1423
  %v1434 = vadd.f32 %v1411, %v1423
  %v1435 = vadd.f32 %v1412, %v1423
  %v1436 = vadd.f32 %v1413, %v1423
  %v1437 = vadd.f32 %v1414, %v1423
  %v1438 = vadd.f32 %v1415, %v1423
  %v1439 = vadd.f32 %v1416, %v1423
  %v1440 = vadd.f32 %v1417, %v1423
  %v1441 = vadd.f32 %v1161, %v1425
  %v1442 = vadd.f32 %v1162, %v1426
  %v1443 = vadd.f32 %v1163, %v1427
  %v1444 = vadd.f32 %v1164, %v1428
  %v1445 = vadd.f32 %v1165, %v1429
  %v1446 = vadd.f32 %v1166, %v1430
  %v1447 = vadd.f32 %v1167, %v1431
  %v1448 = vadd.f32 %v1168, %v1432
  %v1449 = vadd.f32 %v1169, %v1433
  %v1450 = vadd.f32 %v1170, %v1434
  %v1451 = vadd.f32 %v1171, %v1435
  %v1452 = vadd.f32 %v1172, %v1436
  %v1453 = vadd.f32 %v1173, %v1437
  %v1454 = vadd.f32 %v1174, %v1438
  %v1455 = vadd.f32 %v1175, %v1439
  %v1456 = vadd.f32 %v1176, %v1440
  %v1457 = vmax.f32 %v1441, 0.0
  %v1458 = vmax.f32 %v1442, 0.0
  %v1459 = vmax.f32 %v1443, 0.0
  %v1460 = vmax.f32 %v1444, 0.0
  %v1461 = vmax.f32 %v1445, 0.0
  %v1462 = vmax.f32 %v1446, 0.0
  %v1463 = vmax.f32 %v1447, 0.0
  %v1464 = vmax.f32 %v1448, 0.0
  %v1465 = vmax.f32 %v1449, 0.0
  %v1466 = vmax.f32 %v1450, 0.0
  %v1467 = vmax.f32 %v1451, 0.0
  %v1468 = vmax.f32 %v1452, 0.0
  %v1469 = vmax.f32 %v1453, 0.0
  %v1470 = vmax.f32 %v1454, 0.0
  %v1471 = vmax.f32 %v1455, 0.0
  %v1472 = vmax.f32 %v1456, 0.0
  %1473 = vst [vmem:[%s11] sm:$0xff] %v1457
  %1474 = vst [vmem:[%s11 + $0x8] sm:$0xff] %v1458
  %1475 = vst [vmem:[%s11 + $0x10] sm:$0xff] %v1459
  %1476 = vst [vmem:[%s11 + $0x18] sm:$0xff] %v1460
  %1477 = vst [vmem:[%s11 + $0x20] sm:$0xff] %v1461
  %1478 = vst [vmem:[%s11 + $0x28] sm:$0xff] %v1462
  %1479 = vst [vmem:[%s11 + $0x30] sm:$0xff] %v1463
  %1480 = vst [vmem:[%s11 + $0x38] sm:$0xff] %v1464
  %1481 = vst [vmem:[%s11 + $0x40] sm:$0xff] %v1465
  %1482 = vst [vmem:[%s11 + $0x48] sm:$0xff] %v1466
  %1483 = vst [vmem:[%s11 + $0x50] sm:$0xff] %v1467
  %1484 = vst [vmem:[%s11 + $0x58] sm:$0xff] %v1468
  %1485 = vst [vmem:[%s11 + $0x60] sm:$0xff] %v1469
  %1486 = vst [vmem:[%s11 + $0x68] sm:$0xff] %v1470
  %1487 = vst [vmem:[%s11 + $0x70] sm:$0xff] %v1471
  %1488 = vst [vmem:[%s11 + $0x78] sm:$0xff] %v1472
  // Predicated region
  $region46: #{bottleneck_forward.3} parent=0 // pred_check
    _
  $region47: #{bottleneck_forward.3} parent=0 // pred_check_branch
    %1490 = sbr.rel (0) target = $region49
  $region48: #{bottleneck_forward.3} parent=0 // pred_region
    _
  $region49: #{bottleneck_forward.3} parent=0 // pred_fallthru
    _
  // Predicated region
  $region50: #{bottleneck_forward.3} parent=0 // pred_check
    _
  $region51: #{bottleneck_forward.3} parent=0 // pred_check_branch
    %1492 = sbr.rel (0) target = $region53
  $region52: #{bottleneck_forward.3} parent=0 // pred_region
    _
  $region53: #{bottleneck_forward.3} parent=0 // pred_fallthru
    _

</llo_original>
